<compile_context>
chip_gen: v7x
topology: tpu7x:2x2x1
jax: 0.10.0
libtpu: 0.0.40
codegen_flags: <defaults>
</compile_context>

<pallas_src>
import jax
import jax.numpy as jnp
from jax.experimental import pallas as pl
from jax.experimental.pallas import tpu as pltpu

NEG_INF = -1.0e12
SQRT_HALF = 0.7071067811865476


# ----------------------------- in-kernel helpers -----------------------------
def _leaky_relu(x, slope=0.01):
    return jnp.where(x > 0, x, slope * x)


def _softmax_last(x):
    m = jnp.max(x, axis=-1, keepdims=True)
    e = jnp.exp(x - m)
    s = jnp.sum(e, axis=-1, keepdims=True)
    return e * pl.reciprocal(s, approx=True)


def _layernorm_last(x, gamma, beta, eps=1e-5):
    mu = jnp.mean(x, axis=-1, keepdims=True)
    var = jnp.mean((x - mu) ** 2, axis=-1, keepdims=True)
    return (x - mu) * jax.lax.rsqrt(var + eps) * gamma + beta


def _dot(a, b):
    return jnp.dot(a, b, preferred_element_type=jnp.float32)


# ----------------------------- fused Pallas kernel ----------------------------
def ginar_fused_kernel(x_ref, ct_ref,
                       Wemb_ref, bembc_ref, Watt_ref, a12_ref, adj_ref,
                       We2_ref, be2c_ref, Wa_ref, GEb_ref, eye_ref,
                       W1T_ref, W2T_ref, b2_ref, M1_ref, M2_ref, c_ref,
                       gamma_ref, beta_ref,
                       ht_ref, ctn_ref):
    # ---- input embedding (kept in both orientations, one tiny transpose) ----
    x_b = x_ref[...]                                                    # (in, N)
    xemb = _leaky_relu(_dot(Wemb_ref[...], x_b) + bembc_ref[...])       # (emb, N)
    h_in = xemb.T                                                       # (N, emb)

    # ---- interposition attention (per-node GAT-style scores) ----
    h = _dot(h_in, Watt_ref[...])                                       # (N, emb)
    f = _dot(h, a12_ref[...])                                           # (N, 2)
    e = _leaky_relu(f[:, 0:1] + f[:, 1:2].T)                            # (N, N)
    att = _softmax_last(jnp.where(adj_ref[...] > 0, e, NEG_INF))        # (N, N)
    hp = jnp.maximum(_dot(att, h), 0.0)                                 # (N, emb)

    # ---- learned graph ----
    # P1 = (emb2(att_out))^T computed directly in (N, emb) orientation.
    P1 = _dot(We2_ref[...], hp) + be2c_ref[...]                         # (N, emb)
    GE = _dot(P1, Wa_ref[...]) + GEb_ref[...]                           # (N, 2*emb)
    S = jnp.maximum(_dot(GE, GE.T), 0.0)                                # (N, N)
    GLn = _softmax_last(S) + eye_ref[...]                               # (N, N)

    # ---- gated cell update (emb, N) ----
    A = hp.T                                                            # (emb, N)
    L1 = _dot(A, W1T_ref[...])                                          # (emb, N)
    L2 = _dot(A, W2T_ref[...]) + b2_ref[...]                            # (emb, N)
    gamma = gamma_ref[...]
    beta = beta_ref[...]

    # Hoisted: xn_pre = L1@GLn + L1@gd1@W1T@gd2 = L1 @ (GLn + M1)
    x_new = _layernorm_last(_dot(L1, GLn + M1_ref[...]), gamma, beta)
    # g_pre = L2@GLn + (L2@gd1@W2T + b2)@gd2 = L2 @ (GLn + M2) + b2@gd2
    g = _layernorm_last(_dot(L2, GLn + M2_ref[...]) + c_ref[...], gamma, beta)
    g = 0.5 * g * (1.0 + jax.lax.erf(g * SQRT_HALF))    # exact GELU (torch default)
    ft = g                                              # rt == ft in eval mode

    ct = ct_ref[...]
    ct_new = x_new + ft * (ct - x_new)
    elu_c = jnp.where(ct_new > 0, ct_new, jnp.exp(jnp.minimum(ct_new, 0.0)) - 1.0)
    ht = xemb + ft * (elu_c - xemb)

    ht_ref[...] = ht
    ctn_ref[...] = ct_new


# ----------------------------- pallas_call wrapper -----------------------------
def _const2(arr):
    return pl.BlockSpec(arr.shape, lambda b: (0, 0))


def pallas_ginar(x, ct, consts):
    B, in_size, N = x.shape
    emb = ct.shape[1]
    out_shape = (jax.ShapeDtypeStruct((B, emb, N), jnp.float32),
                 jax.ShapeDtypeStruct((B, emb, N), jnp.float32))
    in_specs = [
        pl.BlockSpec((None, in_size, N), lambda b: (b, 0, 0)),   # x
        pl.BlockSpec((None, emb, N), lambda b: (b, 0, 0)),       # ct
    ] + [_const2(a) for a in consts]
    out_specs = [
        pl.BlockSpec((None, emb, N), lambda b: (b, 0, 0)),
        pl.BlockSpec((None, emb, N), lambda b: (b, 0, 0)),
    ]
    # TODO(synk): if num_id scales up, tile the (N,N) operands and set
    # vmem_limit_bytes for v7x's smaller (64 MiB) VMEM.
    return pl.pallas_call(
        ginar_fused_kernel,
        out_shape=out_shape,
        grid=(B,),
        in_specs=in_specs,
        out_specs=out_specs,
        compiler_params=pltpu.CompilerParams(
            dimension_semantics=("parallel",)),
    )(x, ct, *consts)


# ----------------------------- glue (plain JAX, batch-invariant) ----------------
def laplacian_with_self_loop(matrix):
    row_sum = matrix.sum(axis=1)
    d_inv_sqrt = row_sum ** -0.5
    d_inv_sqrt = jnp.where(jnp.isinf(d_inv_sqrt), 0.0, d_inv_sqrt)
    d_mat = jnp.diag(d_inv_sqrt)
    return (matrix @ d_mat).T @ d_mat


def ginar_forward(x, ct, graph_data, p, num_id, emb_size):
    N, emb = num_id, emb_size
    eye = jnp.eye(N, dtype=jnp.float32)

    # attention adjacency mask: softmax(relu(GL GL^T)) + I  (parameter-only)
    adj = jax.nn.softmax(jnp.maximum(p["att_GL"] @ p["att_GL"].T, 0.0), axis=-1) + eye
    # concat a1|a2 -> one (emb, 2) matmul for the attention scores
    a12 = jnp.concatenate([p["att_a"][:emb], p["att_a"][emb:]], axis=1)

    # graph-learn constants: GE = P1 @ Wa + GE_bias, GE_bias = (GL @ W_GL^T) @ Wb
    Wg2T = p["W_GL2"].T
    Wa, Wb = Wg2T[:emb, :], Wg2T[emb:, :]
    GE_bias = (p["GL"] @ p["W_GL"].T) @ Wb                      # (N, 2*emb)

    # normalized laplacians + hoisted batch-invariant chains for the cell
    gd1 = laplacian_with_self_loop(graph_data[0] + eye)
    gd2 = laplacian_with_self_loop(graph_data[1] + eye)
    W1T, W2T = p["W1"].T, p["W2"].T
    M1 = gd1 @ W1T @ gd2                                        # (N, N)
    M2 = gd1 @ W2T @ gd2                                        # (N, N)
    c = p["b2"][None, :] @ gd2                                  # (1, N)

    consts = (
        p["W_emb"],                 # (emb, in)
        p["b_emb"][:, None],        # (emb, 1)
        p["att_W"],                 # (emb, emb)
        a12,                        # (emb, 2)
        adj,                        # (N, N)
        p["W_emb2"],                # (N, N)
        p["b_emb2"][:, None],       # (N, 1)
        Wa,                         # (emb, 2*emb)
        GE_bias,                    # (N, 2*emb)
        eye,                        # (N, N)
        W1T, W2T,                   # (N, N) each
        p["b2"][None, :],           # (1, N)
        M1, M2,                     # (N, N) each
        c,                          # (1, N)
        p["ln_gamma"][None, :],     # (1, N)
        p["ln_beta"][None, :],      # (1, N)
    )
    return pallas_ginar(x, ct, consts)


def init_params(key, num_id, in_size, emb_size, grap_size):
    ks = jax.random.split(key, 13)

    def rn(k, shape, scale=0.1):
        return scale * jax.random.normal(k, shape, dtype=jnp.float32)

    return dict(
        W_emb=rn(ks[0], (emb_size, in_size)),
        b_emb=rn(ks[1], (emb_size,)),
        W_emb2=rn(ks[2], (num_id, num_id)),
        b_emb2=rn(ks[3], (num_id,)),
        att_W=rn(ks[4], (emb_size, emb_size)),
        att_a=rn(ks[5], (2 * emb_size, 1)),
        att_GL=rn(ks[6], (num_id, grap_size)),
        # att.GL2 exists in __init__ but is unused in forward; omitted.
        W1=rn(ks[7], (num_id, num_id)),
        W2=rn(ks[8], (num_id, num_id)),
        b2=rn(ks[9], (num_id,)),
        ln_gamma=jnp.ones((num_id,), jnp.float32),
        ln_beta=jnp.zeros((num_id,), jnp.float32),
        GL=rn(ks[10], (num_id, grap_size)),
        W_GL=rn(ks[11], (emb_size, grap_size)),
        W_GL2=rn(ks[12], (2 * emb_size, 2 * emb_size)),
    )


if __name__ == "__main__":
    B, N, in_size, emb, grap = 2, 16, 8, 32, 8
    key = jax.random.PRNGKey(0)
    kx, kc, kg, kp = jax.random.split(key, 4)

    x = jax.random.normal(kx, (B, in_size, N), jnp.float32)
    ct = jax.random.normal(kc, (B, emb, N), jnp.float32)
    graph_data = jnp.abs(jax.random.normal(kg, (2, N, N), jnp.float32))
    params = init_params(kp, N, in_size, emb, grap)

    ht, ct_new = ginar_forward(x, ct, graph_data, params, N, emb)
    jax.block_until_ready((ht, ct_new))

    assert ht.shape == (B, emb, N) and ct_new.shape == (B, emb, N)
    assert bool(jnp.isfinite(ht).all()) and bool(jnp.isfinite(ct_new).all())
    print("KERNEL_OK")
</pallas_src>

<mosaic_0001>
module attributes {stable_mosaic.version = 11 : i64} {
  func.func @ginar_fused_kernel(%arg0: i32, %arg1: memref<1x8x16xf32, #tpu.memory_space<vmem>>, %arg2: memref<1x32x16xf32, #tpu.memory_space<vmem>>, %arg3: memref<32x8xf32, #tpu.memory_space<vmem>>, %arg4: memref<32x1xf32, #tpu.memory_space<vmem>>, %arg5: memref<32x32xf32, #tpu.memory_space<vmem>>, %arg6: memref<32x2xf32, #tpu.memory_space<vmem>>, %arg7: memref<16x16xf32, #tpu.memory_space<vmem>>, %arg8: memref<16x16xf32, #tpu.memory_space<vmem>>, %arg9: memref<16x1xf32, #tpu.memory_space<vmem>>, %arg10: memref<32x64xf32, #tpu.memory_space<vmem>>, %arg11: memref<16x64xf32, #tpu.memory_space<vmem>>, %arg12: memref<16x16xf32, #tpu.memory_space<vmem>>, %arg13: memref<16x16xf32, #tpu.memory_space<vmem>>, %arg14: memref<16x16xf32, #tpu.memory_space<vmem>>, %arg15: memref<1x16xf32, #tpu.memory_space<vmem>>, %arg16: memref<16x16xf32, #tpu.memory_space<vmem>>, %arg17: memref<16x16xf32, #tpu.memory_space<vmem>>, %arg18: memref<1x16xf32, #tpu.memory_space<vmem>>, %arg19: memref<1x16xf32, #tpu.memory_space<vmem>>, %arg20: memref<1x16xf32, #tpu.memory_space<vmem>>, %arg21: memref<1x32x16xf32, #tpu.memory_space<vmem>>, %arg22: memref<1x32x16xf32, #tpu.memory_space<vmem>>) attributes {dimension_semantics = [#tpu.dimension_semantics<parallel>], iteration_bounds = array<i64: 2>, scalar_prefetch = 0 : i64, scratch_operands = 0 : i64, tpu.core_type = #tpu.core_type<tc>, window_params = [{transform_indices = @transform_0, window_bounds = array<i64: 1, 8, 16>}, {transform_indices = @transform_1, window_bounds = array<i64: 1, 32, 16>}, {pipeline_mode = #tpu.pipeline_mode<synchronous>, transform_indices = @transform_2, window_bounds = array<i64: 32, 8>}, {pipeline_mode = #tpu.pipeline_mode<synchronous>, transform_indices = @transform_3, window_bounds = array<i64: 32, 1>}, {pipeline_mode = #tpu.pipeline_mode<synchronous>, transform_indices = @transform_4, window_bounds = array<i64: 32, 32>}, {pipeline_mode = #tpu.pipeline_mode<synchronous>, transform_indices = @transform_5, window_bounds = array<i64: 32, 2>}, {pipeline_mode = #tpu.pipeline_mode<synchronous>, transform_indices = @transform_6, window_bounds = array<i64: 16, 16>}, {pipeline_mode = #tpu.pipeline_mode<synchronous>, transform_indices = @transform_7, window_bounds = array<i64: 16, 16>}, {pipeline_mode = #tpu.pipeline_mode<synchronous>, transform_indices = @transform_8, window_bounds = array<i64: 16, 1>}, {pipeline_mode = #tpu.pipeline_mode<synchronous>, transform_indices = @transform_9, window_bounds = array<i64: 32, 64>}, {pipeline_mode = #tpu.pipeline_mode<synchronous>, transform_indices = @transform_10, window_bounds = array<i64: 16, 64>}, {pipeline_mode = #tpu.pipeline_mode<synchronous>, transform_indices = @transform_11, window_bounds = array<i64: 16, 16>}, {pipeline_mode = #tpu.pipeline_mode<synchronous>, transform_indices = @transform_12, window_bounds = array<i64: 16, 16>}, {pipeline_mode = #tpu.pipeline_mode<synchronous>, transform_indices = @transform_13, window_bounds = array<i64: 16, 16>}, {pipeline_mode = #tpu.pipeline_mode<synchronous>, transform_indices = @transform_14, window_bounds = array<i64: 1, 16>}, {pipeline_mode = #tpu.pipeline_mode<synchronous>, transform_indices = @transform_15, window_bounds = array<i64: 16, 16>}, {pipeline_mode = #tpu.pipeline_mode<synchronous>, transform_indices = @transform_16, window_bounds = array<i64: 16, 16>}, {pipeline_mode = #tpu.pipeline_mode<synchronous>, transform_indices = @transform_17, window_bounds = array<i64: 1, 16>}, {pipeline_mode = #tpu.pipeline_mode<synchronous>, transform_indices = @transform_18, window_bounds = array<i64: 1, 16>}, {pipeline_mode = #tpu.pipeline_mode<synchronous>, transform_indices = @transform_19, window_bounds = array<i64: 1, 16>}, {transform_indices = @transform_20, window_bounds = array<i64: 1, 32, 16>}, {transform_indices = @transform_21, window_bounds = array<i64: 1, 32, 16>}]} {
    %c0 = arith.constant 0 : index
    %c0_0 = arith.constant 0 : index
    %c0_1 = arith.constant 0 : index
    %0 = vector.load %arg1[%c0, %c0_0, %c0_1] : memref<1x8x16xf32, #tpu.memory_space<vmem>>, vector<1x8x16xf32>
    %1 = vector.shape_cast %0 : vector<1x8x16xf32> to vector<8x16xf32>
    %c0_2 = arith.constant 0 : index
    %c0_3 = arith.constant 0 : index
    %2 = vector.load %arg3[%c0_2, %c0_3] : memref<32x8xf32, #tpu.memory_space<vmem>>, vector<32x8xf32>
    %cst = arith.constant dense<0.000000e+00> : vector<32x16xf32>
    %3 = tpu.matmul %2, %1, %cst {dimension_numbers = #tpu.dot_dimension_numbers<[1], [0], [0], [1], [0, 0, 1, 1], [], []>} : vector<32x8xf32>, vector<8x16xf32>, vector<32x16xf32> -> vector<32x16xf32>
    %c0_4 = arith.constant 0 : index
    %c0_5 = arith.constant 0 : index
    %4 = vector.load %arg4[%c0_4, %c0_5] : memref<32x1xf32, #tpu.memory_space<vmem>>, vector<32x1xf32>
    %5 = vector.broadcast %4 : vector<32x1xf32> to vector<32x16xf32>
    %6 = arith.addf %3, %5 : vector<32x16xf32>
    %cst_6 = arith.constant 0.000000e+00 : f32
    %7 = vector.broadcast %cst_6 : f32 to vector<32x16xf32>
    %8 = arith.cmpf ogt, %6, %7 : vector<32x16xf32>
    %cst_7 = arith.constant 0.00999999977 : f32
    %9 = vector.broadcast %cst_7 : f32 to vector<32x16xf32>
    %10 = arith.mulf %9, %6 : vector<32x16xf32>
    %11 = arith.select %8, %6, %10 : vector<32x16xi1>, vector<32x16xf32>
    %12 = tpu.transpose %11, [1, 0] : vector<32x16xf32> -> vector<16x32xf32>
    %c0_8 = arith.constant 0 : index
    %c0_9 = arith.constant 0 : index
    %13 = vector.load %arg5[%c0_8, %c0_9] : memref<32x32xf32, #tpu.memory_space<vmem>>, vector<32x32xf32>
    %cst_10 = arith.constant dense<0.000000e+00> : vector<16x32xf32>
    %14 = tpu.matmul %12, %13, %cst_10 {dimension_numbers = #tpu.dot_dimension_numbers<[1], [0], [0], [1], [0, 0, 1, 1], [], []>} : vector<16x32xf32>, vector<32x32xf32>, vector<16x32xf32> -> vector<16x32xf32>
    %c0_11 = arith.constant 0 : index
    %c0_12 = arith.constant 0 : index
    %15 = vector.load %arg6[%c0_11, %c0_12] : memref<32x2xf32, #tpu.memory_space<vmem>>, vector<32x2xf32>
    %cst_13 = arith.constant dense<0.000000e+00> : vector<16x2xf32>
    %16 = tpu.matmul %14, %15, %cst_13 {dimension_numbers = #tpu.dot_dimension_numbers<[1], [0], [0], [1], [0, 0, 1, 1], [], []>} : vector<16x32xf32>, vector<32x2xf32>, vector<16x2xf32> -> vector<16x2xf32>
    %17 = vector.extract_strided_slice %16 {offsets = [0, 0], sizes = [16, 1], strides = [1, 1]} : vector<16x2xf32> to vector<16x1xf32>
    %18 = vector.extract_strided_slice %16 {offsets = [0, 1], sizes = [16, 1], strides = [1, 1]} : vector<16x2xf32> to vector<16x1xf32>
    %19 = tpu.transpose %18, [1, 0] : vector<16x1xf32> -> vector<1x16xf32>
    %20 = vector.broadcast %17 : vector<16x1xf32> to vector<16x16xf32>
    %21 = vector.broadcast %19 : vector<1x16xf32> to vector<16x16xf32>
    %22 = arith.addf %20, %21 : vector<16x16xf32>
    %cst_14 = arith.constant 0.000000e+00 : f32
    %23 = vector.broadcast %cst_14 : f32 to vector<16x16xf32>
    %24 = arith.cmpf ogt, %22, %23 : vector<16x16xf32>
    %cst_15 = arith.constant 0.00999999977 : f32
    %25 = vector.broadcast %cst_15 : f32 to vector<16x16xf32>
    %26 = arith.mulf %25, %22 : vector<16x16xf32>
    %27 = arith.select %24, %22, %26 : vector<16x16xi1>, vector<16x16xf32>
    %c0_16 = arith.constant 0 : index
    %c0_17 = arith.constant 0 : index
    %28 = vector.load %arg7[%c0_16, %c0_17] : memref<16x16xf32, #tpu.memory_space<vmem>>, vector<16x16xf32>
    %cst_18 = arith.constant 0.000000e+00 : f32
    %29 = vector.broadcast %cst_18 : f32 to vector<16x16xf32>
    %30 = arith.cmpf ogt, %28, %29 : vector<16x16xf32>
    %cst_19 = arith.constant -9.99999995E+11 : f32
    %31 = vector.broadcast %cst_19 : f32 to vector<16x16xf32>
    %32 = arith.select %30, %27, %31 : vector<16x16xi1>, vector<16x16xf32>
    %cst_20 = arith.constant dense<0xFF800000> : vector<16xf32>
    %33 = vector.multi_reduction <maximumf>, %32, %cst_20 [1] : vector<16x16xf32> to vector<16xf32>
    %34 = vector.shape_cast %33 : vector<16xf32> to vector<16x1xf32>
    %35 = vector.broadcast %34 : vector<16x1xf32> to vector<16x16xf32>
    %36 = arith.subf %32, %35 : vector<16x16xf32>
    %37 = math.exp %36 : vector<16x16xf32>
    %cst_21 = arith.constant dense<0.000000e+00> : vector<16xf32>
    %38 = vector.multi_reduction <add>, %37, %cst_21 [1] : vector<16x16xf32> to vector<16xf32>
    %39 = vector.shape_cast %38 : vector<16xf32> to vector<16x1xf32>
    %40 = tpu.reciprocal %39 {approx = true} : vector<16x1xf32> -> vector<16x1xf32>
    %41 = vector.broadcast %40 : vector<16x1xf32> to vector<16x16xf32>
    %42 = arith.mulf %37, %41 : vector<16x16xf32>
    %cst_22 = arith.constant dense<0.000000e+00> : vector<16x32xf32>
    %43 = tpu.matmul %42, %14, %cst_22 {dimension_numbers = #tpu.dot_dimension_numbers<[1], [0], [0], [1], [0, 0, 1, 1], [], []>} : vector<16x16xf32>, vector<16x32xf32>, vector<16x32xf32> -> vector<16x32xf32>
    %cst_23 = arith.constant 0.000000e+00 : f32
    %44 = vector.broadcast %cst_23 : f32 to vector<16x32xf32>
    %45 = arith.maximumf %43, %44 : vector<16x32xf32>
    %c0_24 = arith.constant 0 : index
    %c0_25 = arith.constant 0 : index
    %46 = vector.load %arg8[%c0_24, %c0_25] : memref<16x16xf32, #tpu.memory_space<vmem>>, vector<16x16xf32>
    %cst_26 = arith.constant dense<0.000000e+00> : vector<16x32xf32>
    %47 = tpu.matmul %46, %45, %cst_26 {dimension_numbers = #tpu.dot_dimension_numbers<[1], [0], [0], [1], [0, 0, 1, 1], [], []>} : vector<16x16xf32>, vector<16x32xf32>, vector<16x32xf32> -> vector<16x32xf32>
    %c0_27 = arith.constant 0 : index
    %c0_28 = arith.constant 0 : index
    %48 = vector.load %arg9[%c0_27, %c0_28] : memref<16x1xf32, #tpu.memory_space<vmem>>, vector<16x1xf32>
    %49 = vector.broadcast %48 : vector<16x1xf32> to vector<16x32xf32>
    %50 = arith.addf %47, %49 : vector<16x32xf32>
    %c0_29 = arith.constant 0 : index
    %c0_30 = arith.constant 0 : index
    %51 = vector.load %arg10[%c0_29, %c0_30] : memref<32x64xf32, #tpu.memory_space<vmem>>, vector<32x64xf32>
    %cst_31 = arith.constant dense<0.000000e+00> : vector<16x64xf32>
    %52 = tpu.matmul %50, %51, %cst_31 {dimension_numbers = #tpu.dot_dimension_numbers<[1], [0], [0], [1], [0, 0, 1, 1], [], []>} : vector<16x32xf32>, vector<32x64xf32>, vector<16x64xf32> -> vector<16x64xf32>
    %c0_32 = arith.constant 0 : index
    %c0_33 = arith.constant 0 : index
    %53 = vector.load %arg11[%c0_32, %c0_33] : memref<16x64xf32, #tpu.memory_space<vmem>>, vector<16x64xf32>
    %54 = arith.addf %52, %53 : vector<16x64xf32>
    %55 = tpu.transpose %54, [1, 0] : vector<16x64xf32> -> vector<64x16xf32>
    %cst_34 = arith.constant dense<0.000000e+00> : vector<16x16xf32>
    %56 = tpu.matmul %54, %55, %cst_34 {dimension_numbers = #tpu.dot_dimension_numbers<[1], [0], [0], [1], [0, 0, 1, 1], [], []>} : vector<16x64xf32>, vector<64x16xf32>, vector<16x16xf32> -> vector<16x16xf32>
    %cst_35 = arith.constant 0.000000e+00 : f32
    %57 = vector.broadcast %cst_35 : f32 to vector<16x16xf32>
    %58 = arith.maximumf %56, %57 : vector<16x16xf32>
    %cst_36 = arith.constant dense<0xFF800000> : vector<16xf32>
    %59 = vector.multi_reduction <maximumf>, %58, %cst_36 [1] : vector<16x16xf32> to vector<16xf32>
    %60 = vector.shape_cast %59 : vector<16xf32> to vector<16x1xf32>
    %61 = vector.broadcast %60 : vector<16x1xf32> to vector<16x16xf32>
    %62 = arith.subf %58, %61 : vector<16x16xf32>
    %63 = math.exp %62 : vector<16x16xf32>
    %cst_37 = arith.constant dense<0.000000e+00> : vector<16xf32>
    %64 = vector.multi_reduction <add>, %63, %cst_37 [1] : vector<16x16xf32> to vector<16xf32>
    %65 = vector.shape_cast %64 : vector<16xf32> to vector<16x1xf32>
    %66 = tpu.reciprocal %65 {approx = true} : vector<16x1xf32> -> vector<16x1xf32>
    %67 = vector.broadcast %66 : vector<16x1xf32> to vector<16x16xf32>
    %68 = arith.mulf %63, %67 : vector<16x16xf32>
    %c0_38 = arith.constant 0 : index
    %c0_39 = arith.constant 0 : index
    %69 = vector.load %arg12[%c0_38, %c0_39] : memref<16x16xf32, #tpu.memory_space<vmem>>, vector<16x16xf32>
    %70 = arith.addf %68, %69 : vector<16x16xf32>
    %71 = tpu.transpose %45, [1, 0] : vector<16x32xf32> -> vector<32x16xf32>
    %c0_40 = arith.constant 0 : index
    %c0_41 = arith.constant 0 : index
    %72 = vector.load %arg13[%c0_40, %c0_41] : memref<16x16xf32, #tpu.memory_space<vmem>>, vector<16x16xf32>
    %cst_42 = arith.constant dense<0.000000e+00> : vector<32x16xf32>
    %73 = tpu.matmul %71, %72, %cst_42 {dimension_numbers = #tpu.dot_dimension_numbers<[1], [0], [0], [1], [0, 0, 1, 1], [], []>} : vector<32x16xf32>, vector<16x16xf32>, vector<32x16xf32> -> vector<32x16xf32>
    %c0_43 = arith.constant 0 : index
    %c0_44 = arith.constant 0 : index
    %74 = vector.load %arg14[%c0_43, %c0_44] : memref<16x16xf32, #tpu.memory_space<vmem>>, vector<16x16xf32>
    %cst_45 = arith.constant dense<0.000000e+00> : vector<32x16xf32>
    %75 = tpu.matmul %71, %74, %cst_45 {dimension_numbers = #tpu.dot_dimension_numbers<[1], [0], [0], [1], [0, 0, 1, 1], [], []>} : vector<32x16xf32>, vector<16x16xf32>, vector<32x16xf32> -> vector<32x16xf32>
    %c0_46 = arith.constant 0 : index
    %c0_47 = arith.constant 0 : index
    %76 = vector.load %arg15[%c0_46, %c0_47] : memref<1x16xf32, #tpu.memory_space<vmem>>, vector<1x16xf32>
    %77 = vector.broadcast %76 : vector<1x16xf32> to vector<32x16xf32>
    %78 = arith.addf %75, %77 : vector<32x16xf32>
    %c0_48 = arith.constant 0 : index
    %c0_49 = arith.constant 0 : index
    %79 = vector.load %arg19[%c0_48, %c0_49] : memref<1x16xf32, #tpu.memory_space<vmem>>, vector<1x16xf32>
    %c0_50 = arith.constant 0 : index
    %c0_51 = arith.constant 0 : index
    %80 = vector.load %arg20[%c0_50, %c0_51] : memref<1x16xf32, #tpu.memory_space<vmem>>, vector<1x16xf32>
    %c0_52 = arith.constant 0 : index
    %c0_53 = arith.constant 0 : index
    %81 = vector.load %arg16[%c0_52, %c0_53] : memref<16x16xf32, #tpu.memory_space<vmem>>, vector<16x16xf32>
    %82 = arith.addf %70, %81 : vector<16x16xf32>
    %cst_54 = arith.constant dense<0.000000e+00> : vector<32x16xf32>
    %83 = tpu.matmul %73, %82, %cst_54 {dimension_numbers = #tpu.dot_dimension_numbers<[1], [0], [0], [1], [0, 0, 1, 1], [], []>} : vector<32x16xf32>, vector<16x16xf32>, vector<32x16xf32> -> vector<32x16xf32>
    %cst_55 = arith.constant dense<0.000000e+00> : vector<32xf32>
    %84 = vector.multi_reduction <add>, %83, %cst_55 [1] : vector<32x16xf32> to vector<32xf32>
    %85 = vector.shape_cast %84 : vector<32xf32> to vector<32x1xf32>
    %cst_56 = arith.constant 1.600000e+01 : f32
    %86 = vector.broadcast %cst_56 : f32 to vector<32x1xf32>
    %87 = arith.divf %85, %86 : vector<32x1xf32>
    %88 = vector.broadcast %87 : vector<32x1xf32> to vector<32x16xf32>
    %89 = arith.subf %83, %88 : vector<32x16xf32>
    %90 = arith.mulf %89, %89 : vector<32x16xf32>
    %cst_57 = arith.constant dense<0.000000e+00> : vector<32xf32>
    %91 = vector.multi_reduction <add>, %90, %cst_57 [1] : vector<32x16xf32> to vector<32xf32>
    %92 = vector.shape_cast %91 : vector<32xf32> to vector<32x1xf32>
    %cst_58 = arith.constant 1.600000e+01 : f32
    %93 = vector.broadcast %cst_58 : f32 to vector<32x1xf32>
    %94 = arith.divf %92, %93 : vector<32x1xf32>
    %95 = vector.broadcast %87 : vector<32x1xf32> to vector<32x16xf32>
    %96 = arith.subf %83, %95 : vector<32x16xf32>
    %cst_59 = arith.constant 9.99999974E-6 : f32
    %97 = vector.broadcast %cst_59 : f32 to vector<32x1xf32>
    %98 = arith.addf %94, %97 : vector<32x1xf32>
    %99 = math.rsqrt %98 : vector<32x1xf32>
    %100 = vector.broadcast %99 : vector<32x1xf32> to vector<32x16xf32>
    %101 = arith.mulf %96, %100 : vector<32x16xf32>
    %102 = vector.broadcast %79 : vector<1x16xf32> to vector<32x16xf32>
    %103 = arith.mulf %101, %102 : vector<32x16xf32>
    %104 = vector.broadcast %80 : vector<1x16xf32> to vector<32x16xf32>
    %105 = arith.addf %103, %104 : vector<32x16xf32>
    %c0_60 = arith.constant 0 : index
    %c0_61 = arith.constant 0 : index
    %106 = vector.load %arg17[%c0_60, %c0_61] : memref<16x16xf32, #tpu.memory_space<vmem>>, vector<16x16xf32>
    %107 = arith.addf %70, %106 : vector<16x16xf32>
    %cst_62 = arith.constant dense<0.000000e+00> : vector<32x16xf32>
    %108 = tpu.matmul %78, %107, %cst_62 {dimension_numbers = #tpu.dot_dimension_numbers<[1], [0], [0], [1], [0, 0, 1, 1], [], []>} : vector<32x16xf32>, vector<16x16xf32>, vector<32x16xf32> -> vector<32x16xf32>
    %c0_63 = arith.constant 0 : index
    %c0_64 = arith.constant 0 : index
    %109 = vector.load %arg18[%c0_63, %c0_64] : memref<1x16xf32, #tpu.memory_space<vmem>>, vector<1x16xf32>
    %110 = vector.broadcast %109 : vector<1x16xf32> to vector<32x16xf32>
    %111 = arith.addf %108, %110 : vector<32x16xf32>
    %cst_65 = arith.constant dense<0.000000e+00> : vector<32xf32>
    %112 = vector.multi_reduction <add>, %111, %cst_65 [1] : vector<32x16xf32> to vector<32xf32>
    %113 = vector.shape_cast %112 : vector<32xf32> to vector<32x1xf32>
    %cst_66 = arith.constant 1.600000e+01 : f32
    %114 = vector.broadcast %cst_66 : f32 to vector<32x1xf32>
    %115 = arith.divf %113, %114 : vector<32x1xf32>
    %116 = vector.broadcast %115 : vector<32x1xf32> to vector<32x16xf32>
    %117 = arith.subf %111, %116 : vector<32x16xf32>
    %118 = arith.mulf %117, %117 : vector<32x16xf32>
    %cst_67 = arith.constant dense<0.000000e+00> : vector<32xf32>
    %119 = vector.multi_reduction <add>, %118, %cst_67 [1] : vector<32x16xf32> to vector<32xf32>
    %120 = vector.shape_cast %119 : vector<32xf32> to vector<32x1xf32>
    %cst_68 = arith.constant 1.600000e+01 : f32
    %121 = vector.broadcast %cst_68 : f32 to vector<32x1xf32>
    %122 = arith.divf %120, %121 : vector<32x1xf32>
    %123 = vector.broadcast %115 : vector<32x1xf32> to vector<32x16xf32>
    %124 = arith.subf %111, %123 : vector<32x16xf32>
    %cst_69 = arith.constant 9.99999974E-6 : f32
    %125 = vector.broadcast %cst_69 : f32 to vector<32x1xf32>
    %126 = arith.addf %122, %125 : vector<32x1xf32>
    %127 = math.rsqrt %126 : vector<32x1xf32>
    %128 = vector.broadcast %127 : vector<32x1xf32> to vector<32x16xf32>
    %129 = arith.mulf %124, %128 : vector<32x16xf32>
    %130 = vector.broadcast %79 : vector<1x16xf32> to vector<32x16xf32>
    %131 = arith.mulf %129, %130 : vector<32x16xf32>
    %132 = vector.broadcast %80 : vector<1x16xf32> to vector<32x16xf32>
    %133 = arith.addf %131, %132 : vector<32x16xf32>
    %cst_70 = arith.constant 5.000000e-01 : f32
    %134 = vector.broadcast %cst_70 : f32 to vector<32x16xf32>
    %135 = arith.mulf %134, %133 : vector<32x16xf32>
    %cst_71 = arith.constant 0.707106769 : f32
    %136 = vector.broadcast %cst_71 : f32 to vector<32x16xf32>
    %137 = arith.mulf %133, %136 : vector<32x16xf32>
    %138 = math.erf %137 : vector<32x16xf32>
    %cst_72 = arith.constant 1.000000e+00 : f32
    %139 = vector.broadcast %cst_72 : f32 to vector<32x16xf32>
    %140 = arith.addf %139, %138 : vector<32x16xf32>
    %141 = arith.mulf %135, %140 : vector<32x16xf32>
    %c0_73 = arith.constant 0 : index
    %c0_74 = arith.constant 0 : index
    %c0_75 = arith.constant 0 : index
    %142 = vector.load %arg2[%c0_73, %c0_74, %c0_75] : memref<1x32x16xf32, #tpu.memory_space<vmem>>, vector<1x32x16xf32>
    %143 = vector.shape_cast %142 : vector<1x32x16xf32> to vector<32x16xf32>
    %144 = arith.subf %143, %105 : vector<32x16xf32>
    %145 = arith.mulf %141, %144 : vector<32x16xf32>
    %146 = arith.addf %105, %145 : vector<32x16xf32>
    %cst_76 = arith.constant 0.000000e+00 : f32
    %147 = vector.broadcast %cst_76 : f32 to vector<32x16xf32>
    %148 = arith.cmpf ogt, %146, %147 : vector<32x16xf32>
    %cst_77 = arith.constant 0.000000e+00 : f32
    %149 = vector.broadcast %cst_77 : f32 to vector<32x16xf32>
    %150 = arith.minimumf %146, %149 : vector<32x16xf32>
    %151 = math.exp %150 : vector<32x16xf32>
    %cst_78 = arith.constant 1.000000e+00 : f32
    %152 = vector.broadcast %cst_78 : f32 to vector<32x16xf32>
    %153 = arith.subf %151, %152 : vector<32x16xf32>
    %154 = arith.select %148, %146, %153 : vector<32x16xi1>, vector<32x16xf32>
    %155 = arith.subf %154, %11 : vector<32x16xf32>
    %156 = arith.mulf %141, %155 : vector<32x16xf32>
    %157 = arith.addf %11, %156 : vector<32x16xf32>
    %c0_79 = arith.constant 0 : index
    %c0_80 = arith.constant 0 : index
    %c0_81 = arith.constant 0 : index
    %158 = vector.load %arg21[%c0_79, %c0_80, %c0_81] : memref<1x32x16xf32, #tpu.memory_space<vmem>>, vector<1x32x16xf32>
    %159 = vector.shape_cast %158 : vector<1x32x16xf32> to vector<32x16xf32>
    %160 = vector.shape_cast %157 : vector<32x16xf32> to vector<1x32x16xf32>
    tpu.vector_store %arg21[%c0_79, %c0_80, %c0_81], %160 {strides = array<i32>} : memref<1x32x16xf32, #tpu.memory_space<vmem>>, vector<1x32x16xf32>,
    %c0_82 = arith.constant 0 : index
    %c0_83 = arith.constant 0 : index
    %c0_84 = arith.constant 0 : index
    %161 = vector.load %arg22[%c0_82, %c0_83, %c0_84] : memref<1x32x16xf32, #tpu.memory_space<vmem>>, vector<1x32x16xf32>
    %162 = vector.shape_cast %161 : vector<1x32x16xf32> to vector<32x16xf32>
    %163 = vector.shape_cast %146 : vector<32x16xf32> to vector<1x32x16xf32>
    tpu.vector_store %arg22[%c0_82, %c0_83, %c0_84], %163 {strides = array<i32>} : memref<1x32x16xf32, #tpu.memory_space<vmem>>, vector<1x32x16xf32>,
    return
  }
  func.func @transform_0(%arg0: i32) -> (i32, i32, i32) {
    %c0_i32 = arith.constant 0 : i32
    %c0_i32_0 = arith.constant 0 : i32
    %c0_i32_1 = arith.constant 0 : i32
    return %arg0, %c0_i32, %c0_i32_0 : i32, i32, i32
  }
  func.func @transform_1(%arg0: i32) -> (i32, i32, i32) {
    %c0_i32 = arith.constant 0 : i32
    %c0_i32_0 = arith.constant 0 : i32
    %c0_i32_1 = arith.constant 0 : i32
    return %arg0, %c0_i32, %c0_i32_0 : i32, i32, i32
  }
  func.func @transform_2(%arg0: i32) -> (i32, i32) {
    %c0_i32 = arith.constant 0 : i32
    %c0_i32_0 = arith.constant 0 : i32
    %c0_i32_1 = arith.constant 0 : i32
    return %c0_i32, %c0_i32_0 : i32, i32
  }
  func.func @transform_3(%arg0: i32) -> (i32, i32) {
    %c0_i32 = arith.constant 0 : i32
    %c0_i32_0 = arith.constant 0 : i32
    %c0_i32_1 = arith.constant 0 : i32
    return %c0_i32, %c0_i32_0 : i32, i32
  }
  func.func @transform_4(%arg0: i32) -> (i32, i32) {
    %c0_i32 = arith.constant 0 : i32
    %c0_i32_0 = arith.constant 0 : i32
    %c0_i32_1 = arith.constant 0 : i32
    return %c0_i32, %c0_i32_0 : i32, i32
  }
  func.func @transform_5(%arg0: i32) -> (i32, i32) {
    %c0_i32 = arith.constant 0 : i32
    %c0_i32_0 = arith.constant 0 : i32
    %c0_i32_1 = arith.constant 0 : i32
    return %c0_i32, %c0_i32_0 : i32, i32
  }
  func.func @transform_6(%arg0: i32) -> (i32, i32) {
    %c0_i32 = arith.constant 0 : i32
    %c0_i32_0 = arith.constant 0 : i32
    %c0_i32_1 = arith.constant 0 : i32
    return %c0_i32, %c0_i32_0 : i32, i32
  }
  func.func @transform_7(%arg0: i32) -> (i32, i32) {
    %c0_i32 = arith.constant 0 : i32
    %c0_i32_0 = arith.constant 0 : i32
    %c0_i32_1 = arith.constant 0 : i32
    return %c0_i32, %c0_i32_0 : i32, i32
  }
  func.func @transform_8(%arg0: i32) -> (i32, i32) {
    %c0_i32 = arith.constant 0 : i32
    %c0_i32_0 = arith.constant 0 : i32
    %c0_i32_1 = arith.constant 0 : i32
    return %c0_i32, %c0_i32_0 : i32, i32
  }
  func.func @transform_9(%arg0: i32) -> (i32, i32) {
    %c0_i32 = arith.constant 0 : i32
    %c0_i32_0 = arith.constant 0 : i32
    %c0_i32_1 = arith.constant 0 : i32
    return %c0_i32, %c0_i32_0 : i32, i32
  }
  func.func @transform_10(%arg0: i32) -> (i32, i32) {
    %c0_i32 = arith.constant 0 : i32
    %c0_i32_0 = arith.constant 0 : i32
    %c0_i32_1 = arith.constant 0 : i32
    return %c0_i32, %c0_i32_0 : i32, i32
  }
  func.func @transform_11(%arg0: i32) -> (i32, i32) {
    %c0_i32 = arith.constant 0 : i32
    %c0_i32_0 = arith.constant 0 : i32
    %c0_i32_1 = arith.constant 0 : i32
    return %c0_i32, %c0_i32_0 : i32, i32
  }
  func.func @transform_12(%arg0: i32) -> (i32, i32) {
    %c0_i32 = arith.constant 0 : i32
    %c0_i32_0 = arith.constant 0 : i32
    %c0_i32_1 = arith.constant 0 : i32
    return %c0_i32, %c0_i32_0 : i32, i32
  }
  func.func @transform_13(%arg0: i32) -> (i32, i32) {
    %c0_i32 = arith.constant 0 : i32
    %c0_i32_0 = arith.constant 0 : i32
    %c0_i32_1 = arith.constant 0 : i32
    return %c0_i32, %c0_i32_0 : i32, i32
  }
  func.func @transform_14(%arg0: i32) -> (i32, i32) {
    %c0_i32 = arith.constant 0 : i32
    %c0_i32_0 = arith.constant 0 : i32
    %c0_i32_1 = arith.constant 0 : i32
    return %c0_i32, %c0_i32_0 : i32, i32
  }
  func.func @transform_15(%arg0: i32) -> (i32, i32) {
    %c0_i32 = arith.constant 0 : i32
    %c0_i32_0 = arith.constant 0 : i32
    %c0_i32_1 = arith.constant 0 : i32
    return %c0_i32, %c0_i32_0 : i32, i32
  }
  func.func @transform_16(%arg0: i32) -> (i32, i32) {
    %c0_i32 = arith.constant 0 : i32
    %c0_i32_0 = arith.constant 0 : i32
    %c0_i32_1 = arith.constant 0 : i32
    return %c0_i32, %c0_i32_0 : i32, i32
  }
  func.func @transform_17(%arg0: i32) -> (i32, i32) {
    %c0_i32 = arith.constant 0 : i32
    %c0_i32_0 = arith.constant 0 : i32
    %c0_i32_1 = arith.constant 0 : i32
    return %c0_i32, %c0_i32_0 : i32, i32
  }
  func.func @transform_18(%arg0: i32) -> (i32, i32) {
    %c0_i32 = arith.constant 0 : i32
    %c0_i32_0 = arith.constant 0 : i32
    %c0_i32_1 = arith.constant 0 : i32
    return %c0_i32, %c0_i32_0 : i32, i32
  }
  func.func @transform_19(%arg0: i32) -> (i32, i32) {
    %c0_i32 = arith.constant 0 : i32
    %c0_i32_0 = arith.constant 0 : i32
    %c0_i32_1 = arith.constant 0 : i32
    return %c0_i32, %c0_i32_0 : i32, i32
  }
  func.func @transform_20(%arg0: i32) -> (i32, i32, i32) {
    %c0_i32 = arith.constant 0 : i32
    %c0_i32_0 = arith.constant 0 : i32
    %c0_i32_1 = arith.constant 0 : i32
    return %arg0, %c0_i32, %c0_i32_0 : i32, i32, i32
  }
  func.func @transform_21(%arg0: i32) -> (i32, i32, i32) {
    %c0_i32 = arith.constant 0 : i32
    %c0_i32_0 = arith.constant 0 : i32
    %c0_i32_1 = arith.constant 0 : i32
    return %arg0, %c0_i32, %c0_i32_0 : i32, i32, i32
  }
}

</mosaic_0001>

<llo_original>
// kernel: tpu_custom_call.1
$region0: #{tpu_custom_call.1}
  #allocation0 [shape = 'u32[]', space=smem, size = 0x4, offset = 0x4, fixed_abs, tag = 'smem constant byte address 0x4 - core index']
  #allocation1 [shape = 'u32[144,128]{1,0:T(1,128)}', space=vmem, size = 0x12000, scoped, tag = 'internal scratch']
  %s0 = inlined_call_operand.vmem [shape: f32[2,8,16], index: 0, kind: input, shape index: {}]
  %s1 = inlined_call_operand.vmem [shape: f32[2,32,16], index: 1, kind: input, shape index: {}]
  %s2 = inlined_call_operand.vmem [shape: f32[32,8], index: 2, kind: input, shape index: {}]
  %s3 = inlined_call_operand.vmem [shape: f32[32,1], index: 3, kind: input, shape index: {}]
  %s4 = inlined_call_operand.vmem [shape: f32[32,32], index: 4, kind: input, shape index: {}]
  %s5 = inlined_call_operand.vmem [shape: f32[32,2], index: 5, kind: input, shape index: {}]
  %s6 = inlined_call_operand.vmem [shape: f32[16,16], index: 6, kind: input, shape index: {}]
  %s7 = inlined_call_operand.vmem [shape: f32[16,16], index: 7, kind: input, shape index: {}]
  %s8 = inlined_call_operand.vmem [shape: f32[16,1], index: 8, kind: input, shape index: {}]
  %s9 = inlined_call_operand.vmem [shape: f32[32,64], index: 9, kind: input, shape index: {}]
  %s10 = inlined_call_operand.vmem [shape: f32[16,64], index: 10, kind: input, shape index: {}]
  %s11 = inlined_call_operand.vmem [shape: f32[16,16], index: 11, kind: input, shape index: {}]
  %s12 = inlined_call_operand.vmem [shape: f32[16,16], index: 12, kind: input, shape index: {}]
  %s13 = inlined_call_operand.vmem [shape: f32[16,16], index: 13, kind: input, shape index: {}]
  %s14 = inlined_call_operand.vmem [shape: f32[1,16], index: 14, kind: input, shape index: {}]
  %s15 = inlined_call_operand.vmem [shape: f32[16,16], index: 15, kind: input, shape index: {}]
  %s16 = inlined_call_operand.vmem [shape: f32[16,16], index: 16, kind: input, shape index: {}]
  %s17 = inlined_call_operand.vmem [shape: f32[1,16], index: 17, kind: input, shape index: {}]
  %s18 = inlined_call_operand.vmem [shape: f32[1,16], index: 18, kind: input, shape index: {}]
  %s19 = inlined_call_operand.vmem [shape: f32[1,16], index: 19, kind: input, shape index: {}]
  %s20 = inlined_call_operand.vmem [shape: f32[2,32,16], index: 20, kind: output, shape index: {0}]
  %s21 = inlined_call_operand.vmem [shape: f32[2,32,16], index: 21, kind: output, shape index: {1}]
  %22 = xla_tuple %s20, %s21
  %s23 = sld [smem:[#allocation0]]
  $region121: #{tpu_custom_call.1} parent=0
    _
  %s25 = ssub.s32 1, %s23
  %s26 = scalar_select 0, %s25, %s23
  loop: start=0, step=1, limit=4
  $region2: #{tpu_custom_call.1} parent=0 // loop_pre_header
    _
  $region3: #{tpu_custom_call.1} parent=0 // loop_header
    %s28 = sphi 0, %s32
    %p29 = scmp.ge.s32.totalorder %s28, 4
    %s38 = sphi 0, %s40
    %s41 = sphi 0, %s38
    %s42 = sphi 0, %s41
    %s58 = sphi 0, %s42
    %s64 = sphi 0, %s66
    %s67 = sphi 0, %s64
    %s68 = sphi 0, %s67
    %s84 = sphi 0, %s68
    %s88 = sphi 0, %s88
    %s90 = sphi 0, %s88
    %s91 = sphi 0, %s90
    %s105 = sphi 0, %s91
    %s109 = sphi 0, %s109
    %s111 = sphi 0, %s109
    %s112 = sphi 0, %s111
    %s126 = sphi 0, %s112
    %s130 = sphi 0, %s130
    %s132 = sphi 0, %s130
    %s133 = sphi 0, %s132
    %s147 = sphi 0, %s133
    %s151 = sphi 0, %s151
    %s153 = sphi 0, %s151
    %s154 = sphi 0, %s153
    %s168 = sphi 0, %s154
    %s172 = sphi 0, %s172
    %s174 = sphi 0, %s172
    %s175 = sphi 0, %s174
    %s189 = sphi 0, %s175
    %s193 = sphi 0, %s193
    %s195 = sphi 0, %s193
    %s196 = sphi 0, %s195
    %s210 = sphi 0, %s196
    %s214 = sphi 0, %s214
    %s216 = sphi 0, %s214
    %s217 = sphi 0, %s216
    %s231 = sphi 0, %s217
    %s235 = sphi 0, %s235
    %s237 = sphi 0, %s235
    %s238 = sphi 0, %s237
    %s252 = sphi 0, %s238
    %s256 = sphi 0, %s256
    %s258 = sphi 0, %s256
    %s259 = sphi 0, %s258
    %s273 = sphi 0, %s259
    %s277 = sphi 0, %s277
    %s279 = sphi 0, %s277
    %s280 = sphi 0, %s279
    %s294 = sphi 0, %s280
    %s298 = sphi 0, %s298
    %s300 = sphi 0, %s298
    %s301 = sphi 0, %s300
    %s315 = sphi 0, %s301
    %s319 = sphi 0, %s319
    %s321 = sphi 0, %s319
    %s322 = sphi 0, %s321
    %s336 = sphi 0, %s322
    %s340 = sphi 0, %s340
    %s342 = sphi 0, %s340
    %s343 = sphi 0, %s342
    %s357 = sphi 0, %s343
    %s361 = sphi 0, %s361
    %s363 = sphi 0, %s361
    %s364 = sphi 0, %s363
    %s378 = sphi 0, %s364
    %s382 = sphi 0, %s382
    %s384 = sphi 0, %s382
    %s385 = sphi 0, %s384
    %s399 = sphi 0, %s385
    %s403 = sphi 0, %s403
    %s405 = sphi 0, %s403
    %s406 = sphi 0, %s405
    %s420 = sphi 0, %s406
    %s424 = sphi 0, %s424
    %s426 = sphi 0, %s424
    %s427 = sphi 0, %s426
    %s441 = sphi 0, %s427
    %s445 = sphi 0, %s445
    %s447 = sphi 0, %s445
    %s448 = sphi 0, %s447
    %s462 = sphi 0, %s448
    %s468 = sphi 0, %s470
    %s471 = sphi 0, %s468
    %s472 = sphi 0, %s471
    %s488 = sphi 0, %s472
    %s494 = sphi 0, %s496
    %s497 = sphi 0, %s494
    %s498 = sphi 0, %s497
    %s514 = sphi 0, %s498
  $region4: #{tpu_custom_call.1} parent=0 // loop_header_branch
    %31 = sbr.rel (%p29) target = $region8
  $region5: #{tpu_custom_call.1} parent=0 // loop_body
    %s33 = ssub.s32 %s28, 1
    %s34 = ssub.s32 %s28, 2
    %s35 = sadd.s32 %s28, 1
    %s36 = ssub.s32 %s28, %s35
    %p37 = scmp.eq.s32.totalorder %s36, 0
    %s39 = sadd.s32 %s38, 1
    %s40 = scalar_select %p37, %s38, %s39
    %p43 = pneg %p37
    %p44 = scmp.eq.s32.totalorder %s28, 1
    %p45 = por %p43, %p44
    %p46 = scmp.ne.s32.totalorder %s38, %s41
    %p47 = scmp.eq.s32.totalorder %s28, 0
    %p48 = por %p46, %p47
    %p49 = scmp.ne.s32.totalorder %s38, %s41
    %p50 = scmp.eq.s32.totalorder %s33, 1
    %p51 = por %p49, %p50
    %p52 = scmp.ne.s32.totalorder %s41, %s42
    %p53 = scmp.eq.s32.totalorder %s33, 0
    %p54 = por %p52, %p53
    %p55 = scmp.ne.s32.totalorder %s41, %s42
    %p56 = scmp.eq.s32.totalorder %s34, 1
    %p57 = por %p55, %p56
    %p59 = scmp.ne.s32.totalorder %s42, %s58
    %p60 = scmp.eq.s32.totalorder %s34, 0
    %p61 = por %p59, %p60
    %s62 = ssub.s32 %s28, %s35
    %p63 = scmp.eq.s32.totalorder %s62, 0
    %s65 = sadd.s32 %s64, 1
    %s66 = scalar_select %p63, %s64, %s65
    %p69 = pneg %p63
    %p70 = scmp.eq.s32.totalorder %s28, 1
    %p71 = por %p69, %p70
    %p72 = scmp.ne.s32.totalorder %s64, %s67
    %p73 = scmp.eq.s32.totalorder %s28, 0
    %p74 = por %p72, %p73
    %p75 = scmp.ne.s32.totalorder %s64, %s67
    %p76 = scmp.eq.s32.totalorder %s33, 1
    %p77 = por %p75, %p76
    %p78 = scmp.ne.s32.totalorder %s67, %s68
    %p79 = scmp.eq.s32.totalorder %s33, 0
    %p80 = por %p78, %p79
    %p81 = scmp.ne.s32.totalorder %s67, %s68
    %p82 = scmp.eq.s32.totalorder %s34, 1
    %p83 = por %p81, %p82
    %p85 = scmp.ne.s32.totalorder %s68, %s84
    %p86 = scmp.eq.s32.totalorder %s34, 0
    %p87 = por %p85, %p86
    %s89 = sadd.s32 %s88, 1
    %p92 = scmp.eq.s32.totalorder %s28, 1
    %p93 = scmp.ne.s32.totalorder %s88, %s90
    %p94 = scmp.eq.s32.totalorder %s28, 0
    %p95 = por %p93, %p94
    %p96 = scmp.ne.s32.totalorder %s88, %s90
    %p97 = scmp.eq.s32.totalorder %s33, 1
    %p98 = por %p96, %p97
    %p99 = scmp.ne.s32.totalorder %s90, %s91
    %p100 = scmp.eq.s32.totalorder %s33, 0
    %p101 = por %p99, %p100
    %p102 = scmp.ne.s32.totalorder %s90, %s91
    %p103 = scmp.eq.s32.totalorder %s34, 1
    %p104 = por %p102, %p103
    %p106 = scmp.ne.s32.totalorder %s91, %s105
    %p107 = scmp.eq.s32.totalorder %s34, 0
    %p108 = por %p106, %p107
    %s110 = sadd.s32 %s109, 1
    %p113 = scmp.eq.s32.totalorder %s28, 1
    %p114 = scmp.ne.s32.totalorder %s109, %s111
    %p115 = scmp.eq.s32.totalorder %s28, 0
    %p116 = por %p114, %p115
    %p117 = scmp.ne.s32.totalorder %s109, %s111
    %p118 = scmp.eq.s32.totalorder %s33, 1
    %p119 = por %p117, %p118
    %p120 = scmp.ne.s32.totalorder %s111, %s112
    %p121 = scmp.eq.s32.totalorder %s33, 0
    %p122 = por %p120, %p121
    %p123 = scmp.ne.s32.totalorder %s111, %s112
    %p124 = scmp.eq.s32.totalorder %s34, 1
    %p125 = por %p123, %p124
    %p127 = scmp.ne.s32.totalorder %s112, %s126
    %p128 = scmp.eq.s32.totalorder %s34, 0
    %p129 = por %p127, %p128
    %s131 = sadd.s32 %s130, 1
    %p134 = scmp.eq.s32.totalorder %s28, 1
    %p135 = scmp.ne.s32.totalorder %s130, %s132
    %p136 = scmp.eq.s32.totalorder %s28, 0
    %p137 = por %p135, %p136
    %p138 = scmp.ne.s32.totalorder %s130, %s132
    %p139 = scmp.eq.s32.totalorder %s33, 1
    %p140 = por %p138, %p139
    %p141 = scmp.ne.s32.totalorder %s132, %s133
    %p142 = scmp.eq.s32.totalorder %s33, 0
    %p143 = por %p141, %p142
    %p144 = scmp.ne.s32.totalorder %s132, %s133
    %p145 = scmp.eq.s32.totalorder %s34, 1
    %p146 = por %p144, %p145
    %p148 = scmp.ne.s32.totalorder %s133, %s147
    %p149 = scmp.eq.s32.totalorder %s34, 0
    %p150 = por %p148, %p149
    %s152 = sadd.s32 %s151, 1
    %p155 = scmp.eq.s32.totalorder %s28, 1
    %p156 = scmp.ne.s32.totalorder %s151, %s153
    %p157 = scmp.eq.s32.totalorder %s28, 0
    %p158 = por %p156, %p157
    %p159 = scmp.ne.s32.totalorder %s151, %s153
    %p160 = scmp.eq.s32.totalorder %s33, 1
    %p161 = por %p159, %p160
    %p162 = scmp.ne.s32.totalorder %s153, %s154
    %p163 = scmp.eq.s32.totalorder %s33, 0
    %p164 = por %p162, %p163
    %p165 = scmp.ne.s32.totalorder %s153, %s154
    %p166 = scmp.eq.s32.totalorder %s34, 1
    %p167 = por %p165, %p166
    %p169 = scmp.ne.s32.totalorder %s154, %s168
    %p170 = scmp.eq.s32.totalorder %s34, 0
    %p171 = por %p169, %p170
    %s173 = sadd.s32 %s172, 1
    %p176 = scmp.eq.s32.totalorder %s28, 1
    %p177 = scmp.ne.s32.totalorder %s172, %s174
    %p178 = scmp.eq.s32.totalorder %s28, 0
    %p179 = por %p177, %p178
    %p180 = scmp.ne.s32.totalorder %s172, %s174
    %p181 = scmp.eq.s32.totalorder %s33, 1
    %p182 = por %p180, %p181
    %p183 = scmp.ne.s32.totalorder %s174, %s175
    %p184 = scmp.eq.s32.totalorder %s33, 0
    %p185 = por %p183, %p184
    %p186 = scmp.ne.s32.totalorder %s174, %s175
    %p187 = scmp.eq.s32.totalorder %s34, 1
    %p188 = por %p186, %p187
    %p190 = scmp.ne.s32.totalorder %s175, %s189
    %p191 = scmp.eq.s32.totalorder %s34, 0
    %p192 = por %p190, %p191
    %s194 = sadd.s32 %s193, 1
    %p197 = scmp.eq.s32.totalorder %s28, 1
    %p198 = scmp.ne.s32.totalorder %s193, %s195
    %p199 = scmp.eq.s32.totalorder %s28, 0
    %p200 = por %p198, %p199
    %p201 = scmp.ne.s32.totalorder %s193, %s195
    %p202 = scmp.eq.s32.totalorder %s33, 1
    %p203 = por %p201, %p202
    %p204 = scmp.ne.s32.totalorder %s195, %s196
    %p205 = scmp.eq.s32.totalorder %s33, 0
    %p206 = por %p204, %p205
    %p207 = scmp.ne.s32.totalorder %s195, %s196
    %p208 = scmp.eq.s32.totalorder %s34, 1
    %p209 = por %p207, %p208
    %p211 = scmp.ne.s32.totalorder %s196, %s210
    %p212 = scmp.eq.s32.totalorder %s34, 0
    %p213 = por %p211, %p212
    %s215 = sadd.s32 %s214, 1
    %p218 = scmp.eq.s32.totalorder %s28, 1
    %p219 = scmp.ne.s32.totalorder %s214, %s216
    %p220 = scmp.eq.s32.totalorder %s28, 0
    %p221 = por %p219, %p220
    %p222 = scmp.ne.s32.totalorder %s214, %s216
    %p223 = scmp.eq.s32.totalorder %s33, 1
    %p224 = por %p222, %p223
    %p225 = scmp.ne.s32.totalorder %s216, %s217
    %p226 = scmp.eq.s32.totalorder %s33, 0
    %p227 = por %p225, %p226
    %p228 = scmp.ne.s32.totalorder %s216, %s217
    %p229 = scmp.eq.s32.totalorder %s34, 1
    %p230 = por %p228, %p229
    %p232 = scmp.ne.s32.totalorder %s217, %s231
    %p233 = scmp.eq.s32.totalorder %s34, 0
    %p234 = por %p232, %p233
    %s236 = sadd.s32 %s235, 1
    %p239 = scmp.eq.s32.totalorder %s28, 1
    %p240 = scmp.ne.s32.totalorder %s235, %s237
    %p241 = scmp.eq.s32.totalorder %s28, 0
    %p242 = por %p240, %p241
    %p243 = scmp.ne.s32.totalorder %s235, %s237
    %p244 = scmp.eq.s32.totalorder %s33, 1
    %p245 = por %p243, %p244
    %p246 = scmp.ne.s32.totalorder %s237, %s238
    %p247 = scmp.eq.s32.totalorder %s33, 0
    %p248 = por %p246, %p247
    %p249 = scmp.ne.s32.totalorder %s237, %s238
    %p250 = scmp.eq.s32.totalorder %s34, 1
    %p251 = por %p249, %p250
    %p253 = scmp.ne.s32.totalorder %s238, %s252
    %p254 = scmp.eq.s32.totalorder %s34, 0
    %p255 = por %p253, %p254
    %s257 = sadd.s32 %s256, 1
    %p260 = scmp.eq.s32.totalorder %s28, 1
    %p261 = scmp.ne.s32.totalorder %s256, %s258
    %p262 = scmp.eq.s32.totalorder %s28, 0
    %p263 = por %p261, %p262
    %p264 = scmp.ne.s32.totalorder %s256, %s258
    %p265 = scmp.eq.s32.totalorder %s33, 1
    %p266 = por %p264, %p265
    %p267 = scmp.ne.s32.totalorder %s258, %s259
    %p268 = scmp.eq.s32.totalorder %s33, 0
    %p269 = por %p267, %p268
    %p270 = scmp.ne.s32.totalorder %s258, %s259
    %p271 = scmp.eq.s32.totalorder %s34, 1
    %p272 = por %p270, %p271
    %p274 = scmp.ne.s32.totalorder %s259, %s273
    %p275 = scmp.eq.s32.totalorder %s34, 0
    %p276 = por %p274, %p275
    %s278 = sadd.s32 %s277, 1
    %p281 = scmp.eq.s32.totalorder %s28, 1
    %p282 = scmp.ne.s32.totalorder %s277, %s279
    %p283 = scmp.eq.s32.totalorder %s28, 0
    %p284 = por %p282, %p283
    %p285 = scmp.ne.s32.totalorder %s277, %s279
    %p286 = scmp.eq.s32.totalorder %s33, 1
    %p287 = por %p285, %p286
    %p288 = scmp.ne.s32.totalorder %s279, %s280
    %p289 = scmp.eq.s32.totalorder %s33, 0
    %p290 = por %p288, %p289
    %p291 = scmp.ne.s32.totalorder %s279, %s280
    %p292 = scmp.eq.s32.totalorder %s34, 1
    %p293 = por %p291, %p292
    %p295 = scmp.ne.s32.totalorder %s280, %s294
    %p296 = scmp.eq.s32.totalorder %s34, 0
    %p297 = por %p295, %p296
    %s299 = sadd.s32 %s298, 1
    %p302 = scmp.eq.s32.totalorder %s28, 1
    %p303 = scmp.ne.s32.totalorder %s298, %s300
    %p304 = scmp.eq.s32.totalorder %s28, 0
    %p305 = por %p303, %p304
    %p306 = scmp.ne.s32.totalorder %s298, %s300
    %p307 = scmp.eq.s32.totalorder %s33, 1
    %p308 = por %p306, %p307
    %p309 = scmp.ne.s32.totalorder %s300, %s301
    %p310 = scmp.eq.s32.totalorder %s33, 0
    %p311 = por %p309, %p310
    %p312 = scmp.ne.s32.totalorder %s300, %s301
    %p313 = scmp.eq.s32.totalorder %s34, 1
    %p314 = por %p312, %p313
    %p316 = scmp.ne.s32.totalorder %s301, %s315
    %p317 = scmp.eq.s32.totalorder %s34, 0
    %p318 = por %p316, %p317
    %s320 = sadd.s32 %s319, 1
    %p323 = scmp.eq.s32.totalorder %s28, 1
    %p324 = scmp.ne.s32.totalorder %s319, %s321
    %p325 = scmp.eq.s32.totalorder %s28, 0
    %p326 = por %p324, %p325
    %p327 = scmp.ne.s32.totalorder %s319, %s321
    %p328 = scmp.eq.s32.totalorder %s33, 1
    %p329 = por %p327, %p328
    %p330 = scmp.ne.s32.totalorder %s321, %s322
    %p331 = scmp.eq.s32.totalorder %s33, 0
    %p332 = por %p330, %p331
    %p333 = scmp.ne.s32.totalorder %s321, %s322
    %p334 = scmp.eq.s32.totalorder %s34, 1
    %p335 = por %p333, %p334
    %p337 = scmp.ne.s32.totalorder %s322, %s336
    %p338 = scmp.eq.s32.totalorder %s34, 0
    %p339 = por %p337, %p338
    %s341 = sadd.s32 %s340, 1
    %p344 = scmp.eq.s32.totalorder %s28, 1
    %p345 = scmp.ne.s32.totalorder %s340, %s342
    %p346 = scmp.eq.s32.totalorder %s28, 0
    %p347 = por %p345, %p346
    %p348 = scmp.ne.s32.totalorder %s340, %s342
    %p349 = scmp.eq.s32.totalorder %s33, 1
    %p350 = por %p348, %p349
    %p351 = scmp.ne.s32.totalorder %s342, %s343
    %p352 = scmp.eq.s32.totalorder %s33, 0
    %p353 = por %p351, %p352
    %p354 = scmp.ne.s32.totalorder %s342, %s343
    %p355 = scmp.eq.s32.totalorder %s34, 1
    %p356 = por %p354, %p355
    %p358 = scmp.ne.s32.totalorder %s343, %s357
    %p359 = scmp.eq.s32.totalorder %s34, 0
    %p360 = por %p358, %p359
    %s362 = sadd.s32 %s361, 1
    %p365 = scmp.eq.s32.totalorder %s28, 1
    %p366 = scmp.ne.s32.totalorder %s361, %s363
    %p367 = scmp.eq.s32.totalorder %s28, 0
    %p368 = por %p366, %p367
    %p369 = scmp.ne.s32.totalorder %s361, %s363
    %p370 = scmp.eq.s32.totalorder %s33, 1
    %p371 = por %p369, %p370
    %p372 = scmp.ne.s32.totalorder %s363, %s364
    %p373 = scmp.eq.s32.totalorder %s33, 0
    %p374 = por %p372, %p373
    %p375 = scmp.ne.s32.totalorder %s363, %s364
    %p376 = scmp.eq.s32.totalorder %s34, 1
    %p377 = por %p375, %p376
    %p379 = scmp.ne.s32.totalorder %s364, %s378
    %p380 = scmp.eq.s32.totalorder %s34, 0
    %p381 = por %p379, %p380
    %s383 = sadd.s32 %s382, 1
    %p386 = scmp.eq.s32.totalorder %s28, 1
    %p387 = scmp.ne.s32.totalorder %s382, %s384
    %p388 = scmp.eq.s32.totalorder %s28, 0
    %p389 = por %p387, %p388
    %p390 = scmp.ne.s32.totalorder %s382, %s384
    %p391 = scmp.eq.s32.totalorder %s33, 1
    %p392 = por %p390, %p391
    %p393 = scmp.ne.s32.totalorder %s384, %s385
    %p394 = scmp.eq.s32.totalorder %s33, 0
    %p395 = por %p393, %p394
    %p396 = scmp.ne.s32.totalorder %s384, %s385
    %p397 = scmp.eq.s32.totalorder %s34, 1
    %p398 = por %p396, %p397
    %p400 = scmp.ne.s32.totalorder %s385, %s399
    %p401 = scmp.eq.s32.totalorder %s34, 0
    %p402 = por %p400, %p401
    %s404 = sadd.s32 %s403, 1
    %p407 = scmp.eq.s32.totalorder %s28, 1
    %p408 = scmp.ne.s32.totalorder %s403, %s405
    %p409 = scmp.eq.s32.totalorder %s28, 0
    %p410 = por %p408, %p409
    %p411 = scmp.ne.s32.totalorder %s403, %s405
    %p412 = scmp.eq.s32.totalorder %s33, 1
    %p413 = por %p411, %p412
    %p414 = scmp.ne.s32.totalorder %s405, %s406
    %p415 = scmp.eq.s32.totalorder %s33, 0
    %p416 = por %p414, %p415
    %p417 = scmp.ne.s32.totalorder %s405, %s406
    %p418 = scmp.eq.s32.totalorder %s34, 1
    %p419 = por %p417, %p418
    %p421 = scmp.ne.s32.totalorder %s406, %s420
    %p422 = scmp.eq.s32.totalorder %s34, 0
    %p423 = por %p421, %p422
    %s425 = sadd.s32 %s424, 1
    %p428 = scmp.eq.s32.totalorder %s28, 1
    %p429 = scmp.ne.s32.totalorder %s424, %s426
    %p430 = scmp.eq.s32.totalorder %s28, 0
    %p431 = por %p429, %p430
    %p432 = scmp.ne.s32.totalorder %s424, %s426
    %p433 = scmp.eq.s32.totalorder %s33, 1
    %p434 = por %p432, %p433
    %p435 = scmp.ne.s32.totalorder %s426, %s427
    %p436 = scmp.eq.s32.totalorder %s33, 0
    %p437 = por %p435, %p436
    %p438 = scmp.ne.s32.totalorder %s426, %s427
    %p439 = scmp.eq.s32.totalorder %s34, 1
    %p440 = por %p438, %p439
    %p442 = scmp.ne.s32.totalorder %s427, %s441
    %p443 = scmp.eq.s32.totalorder %s34, 0
    %p444 = por %p442, %p443
    %s446 = sadd.s32 %s445, 1
    %p449 = scmp.eq.s32.totalorder %s28, 1
    %p450 = scmp.ne.s32.totalorder %s445, %s447
    %p451 = scmp.eq.s32.totalorder %s28, 0
    %p452 = por %p450, %p451
    %p453 = scmp.ne.s32.totalorder %s445, %s447
    %p454 = scmp.eq.s32.totalorder %s33, 1
    %p455 = por %p453, %p454
    %p456 = scmp.ne.s32.totalorder %s447, %s448
    %p457 = scmp.eq.s32.totalorder %s33, 0
    %p458 = por %p456, %p457
    %p459 = scmp.ne.s32.totalorder %s447, %s448
    %p460 = scmp.eq.s32.totalorder %s34, 1
    %p461 = por %p459, %p460
    %p463 = scmp.ne.s32.totalorder %s448, %s462
    %p464 = scmp.eq.s32.totalorder %s34, 0
    %p465 = por %p463, %p464
    %s466 = ssub.s32 %s28, %s35
    %p467 = scmp.eq.s32.totalorder %s466, 0
    %s469 = sadd.s32 %s468, 1
    %s470 = scalar_select %p467, %s468, %s469
    %p473 = pneg %p467
    %p474 = scmp.eq.s32.totalorder %s28, 1
    %p475 = por %p473, %p474
    %p476 = scmp.ne.s32.totalorder %s468, %s471
    %p477 = scmp.eq.s32.totalorder %s28, 0
    %p478 = por %p476, %p477
    %p479 = scmp.ne.s32.totalorder %s468, %s471
    %p480 = scmp.eq.s32.totalorder %s33, 1
    %p481 = por %p479, %p480
    %p482 = scmp.ne.s32.totalorder %s471, %s472
    %p483 = scmp.eq.s32.totalorder %s33, 0
    %p484 = por %p482, %p483
    %p485 = scmp.ne.s32.totalorder %s471, %s472
    %p486 = scmp.eq.s32.totalorder %s34, 1
    %p487 = por %p485, %p486
    %p489 = scmp.ne.s32.totalorder %s472, %s488
    %p490 = scmp.eq.s32.totalorder %s34, 0
    %p491 = por %p489, %p490
    %s492 = ssub.s32 %s28, %s35
    %p493 = scmp.eq.s32.totalorder %s492, 0
    %s495 = sadd.s32 %s494, 1
    %s496 = scalar_select %p493, %s494, %s495
    %p499 = pneg %p493
    %p500 = scmp.eq.s32.totalorder %s28, 1
    %p501 = por %p499, %p500
    %p502 = scmp.ne.s32.totalorder %s494, %s497
    %p503 = scmp.eq.s32.totalorder %s28, 0
    %p504 = por %p502, %p503
    %p505 = scmp.ne.s32.totalorder %s494, %s497
    %p506 = scmp.eq.s32.totalorder %s33, 1
    %p507 = por %p505, %p506
    %p508 = scmp.ne.s32.totalorder %s497, %s498
    %p509 = scmp.eq.s32.totalorder %s33, 0
    %p510 = por %p508, %p509
    %p511 = scmp.ne.s32.totalorder %s497, %s498
    %p512 = scmp.eq.s32.totalorder %s34, 1
    %p513 = por %p511, %p512
    %p515 = scmp.ne.s32.totalorder %s498, %s514
    %p516 = scmp.eq.s32.totalorder %s34, 0
    %p517 = por %p515, %p516
    %p518 = scmp.le.s32.totalorder 1, %s28
    %p519 = scmp.lt.s32.totalorder %s28, 3
    %p520 = pnand %p518, %p519
    %p521 = pneg %p520
    // Predicated region
    $region9: #{tpu_custom_call.1} parent=5 // pred_check
      _
    $region10: #{tpu_custom_call.1} parent=5 // pred_check_branch
      %523 = sbr.rel (%p520) target = $region12
    $region11: #{tpu_custom_call.1} parent=5 // pred_region
      %s524 = ssub.s32 %s28, 1
      // Predicated region
      $region13: #{tpu_custom_call.1} parent=11 // pred_check
        %p525 = pneg %p101
      $region14: #{tpu_custom_call.1} parent=11 // pred_check_branch
        %527 = sbr.rel (%p525) target = $region16
      $region15: #{tpu_custom_call.1} parent=11 // pred_region
        _
      $region16: #{tpu_custom_call.1} parent=11 // pred_fallthru
        _
      // Predicated region
      $region17: #{tpu_custom_call.1} parent=11 // pred_check
        %p528 = pneg %p122
      $region18: #{tpu_custom_call.1} parent=11 // pred_check_branch
        %530 = sbr.rel (%p528) target = $region20
      $region19: #{tpu_custom_call.1} parent=11 // pred_region
        _
      $region20: #{tpu_custom_call.1} parent=11 // pred_fallthru
        _
      // Predicated region
      $region21: #{tpu_custom_call.1} parent=11 // pred_check
        %p531 = pneg %p143
      $region22: #{tpu_custom_call.1} parent=11 // pred_check_branch
        %533 = sbr.rel (%p531) target = $region24
      $region23: #{tpu_custom_call.1} parent=11 // pred_region
        _
      $region24: #{tpu_custom_call.1} parent=11 // pred_fallthru
        _
      // Predicated region
      $region25: #{tpu_custom_call.1} parent=11 // pred_check
        %p534 = pneg %p164
      $region26: #{tpu_custom_call.1} parent=11 // pred_check_branch
        %536 = sbr.rel (%p534) target = $region28
      $region27: #{tpu_custom_call.1} parent=11 // pred_region
        _
      $region28: #{tpu_custom_call.1} parent=11 // pred_fallthru
        _
      // Predicated region
      $region29: #{tpu_custom_call.1} parent=11 // pred_check
        %p537 = pneg %p185
      $region30: #{tpu_custom_call.1} parent=11 // pred_check_branch
        %539 = sbr.rel (%p537) target = $region32
      $region31: #{tpu_custom_call.1} parent=11 // pred_region
        _
      $region32: #{tpu_custom_call.1} parent=11 // pred_fallthru
        _
      // Predicated region
      $region33: #{tpu_custom_call.1} parent=11 // pred_check
        %p540 = pneg %p206
      $region34: #{tpu_custom_call.1} parent=11 // pred_check_branch
        %542 = sbr.rel (%p540) target = $region36
      $region35: #{tpu_custom_call.1} parent=11 // pred_region
        _
      $region36: #{tpu_custom_call.1} parent=11 // pred_fallthru
        _
      // Predicated region
      $region37: #{tpu_custom_call.1} parent=11 // pred_check
        %p543 = pneg %p227
      $region38: #{tpu_custom_call.1} parent=11 // pred_check_branch
        %545 = sbr.rel (%p543) target = $region40
      $region39: #{tpu_custom_call.1} parent=11 // pred_region
        _
      $region40: #{tpu_custom_call.1} parent=11 // pred_fallthru
        _
      // Predicated region
      $region41: #{tpu_custom_call.1} parent=11 // pred_check
        %p546 = pneg %p248
      $region42: #{tpu_custom_call.1} parent=11 // pred_check_branch
        %548 = sbr.rel (%p546) target = $region44
      $region43: #{tpu_custom_call.1} parent=11 // pred_region
        _
      $region44: #{tpu_custom_call.1} parent=11 // pred_fallthru
        _
      // Predicated region
      $region45: #{tpu_custom_call.1} parent=11 // pred_check
        %p549 = pneg %p269
      $region46: #{tpu_custom_call.1} parent=11 // pred_check_branch
        %551 = sbr.rel (%p549) target = $region48
      $region47: #{tpu_custom_call.1} parent=11 // pred_region
        _
      $region48: #{tpu_custom_call.1} parent=11 // pred_fallthru
        _
      // Predicated region
      $region49: #{tpu_custom_call.1} parent=11 // pred_check
        %p552 = pneg %p290
      $region50: #{tpu_custom_call.1} parent=11 // pred_check_branch
        %554 = sbr.rel (%p552) target = $region52
      $region51: #{tpu_custom_call.1} parent=11 // pred_region
        _
      $region52: #{tpu_custom_call.1} parent=11 // pred_fallthru
        _
      // Predicated region
      $region53: #{tpu_custom_call.1} parent=11 // pred_check
        %p555 = pneg %p311
      $region54: #{tpu_custom_call.1} parent=11 // pred_check_branch
        %557 = sbr.rel (%p555) target = $region56
      $region55: #{tpu_custom_call.1} parent=11 // pred_region
        _
      $region56: #{tpu_custom_call.1} parent=11 // pred_fallthru
        _
      // Predicated region
      $region57: #{tpu_custom_call.1} parent=11 // pred_check
        %p558 = pneg %p332
      $region58: #{tpu_custom_call.1} parent=11 // pred_check_branch
        %560 = sbr.rel (%p558) target = $region60
      $region59: #{tpu_custom_call.1} parent=11 // pred_region
        _
      $region60: #{tpu_custom_call.1} parent=11 // pred_fallthru
        _
      // Predicated region
      $region61: #{tpu_custom_call.1} parent=11 // pred_check
        %p561 = pneg %p353
      $region62: #{tpu_custom_call.1} parent=11 // pred_check_branch
        %563 = sbr.rel (%p561) target = $region64
      $region63: #{tpu_custom_call.1} parent=11 // pred_region
        _
      $region64: #{tpu_custom_call.1} parent=11 // pred_fallthru
        _
      // Predicated region
      $region65: #{tpu_custom_call.1} parent=11 // pred_check
        %p564 = pneg %p374
      $region66: #{tpu_custom_call.1} parent=11 // pred_check_branch
        %566 = sbr.rel (%p564) target = $region68
      $region67: #{tpu_custom_call.1} parent=11 // pred_region
        _
      $region68: #{tpu_custom_call.1} parent=11 // pred_fallthru
        _
      // Predicated region
      $region69: #{tpu_custom_call.1} parent=11 // pred_check
        %p567 = pneg %p395
      $region70: #{tpu_custom_call.1} parent=11 // pred_check_branch
        %569 = sbr.rel (%p567) target = $region72
      $region71: #{tpu_custom_call.1} parent=11 // pred_region
        _
      $region72: #{tpu_custom_call.1} parent=11 // pred_fallthru
        _
      // Predicated region
      $region73: #{tpu_custom_call.1} parent=11 // pred_check
        %p570 = pneg %p416
      $region74: #{tpu_custom_call.1} parent=11 // pred_check_branch
        %572 = sbr.rel (%p570) target = $region76
      $region75: #{tpu_custom_call.1} parent=11 // pred_region
        _
      $region76: #{tpu_custom_call.1} parent=11 // pred_fallthru
        _
      // Predicated region
      $region77: #{tpu_custom_call.1} parent=11 // pred_check
        %p573 = pneg %p437
      $region78: #{tpu_custom_call.1} parent=11 // pred_check_branch
        %575 = sbr.rel (%p573) target = $region80
      $region79: #{tpu_custom_call.1} parent=11 // pred_region
        _
      $region80: #{tpu_custom_call.1} parent=11 // pred_fallthru
        _
      // Predicated region
      $region81: #{tpu_custom_call.1} parent=11 // pred_check
        %p576 = pneg %p458
      $region82: #{tpu_custom_call.1} parent=11 // pred_check_branch
        %578 = sbr.rel (%p576) target = $region84
      $region83: #{tpu_custom_call.1} parent=11 // pred_region
        _
      $region84: #{tpu_custom_call.1} parent=11 // pred_fallthru
        _
    $region12: #{tpu_custom_call.1} parent=5 // pred_fallthru
      _
    %p579 = scmp.lt.s32.totalorder %s28, 2
    // Predicated region
    $region85: #{tpu_custom_call.1} parent=5 // pred_check
      %p580 = pneg %p579
    $region86: #{tpu_custom_call.1} parent=5 // pred_check_branch
      %582 = sbr.rel (%p580) target = $region88
    $region87: #{tpu_custom_call.1} parent=5 // pred_region
      // Predicated region
      $region89: #{tpu_custom_call.1} parent=87 // pred_check
        %p583 = pneg %p48
      $region90: #{tpu_custom_call.1} parent=87 // pred_check_branch
        %585 = sbr.rel (%p583) target = $region92
      $region91: #{tpu_custom_call.1} parent=87 // pred_region
        %p586 = scmp.lt.s32.totalorder %s28, 1
        %s587 = scalar_select %p586, %s28, 1
        %s588 = smul.addr %s587, 8
        %s589 = scalar_lea.vmem %s0, %s588
      $region92: #{tpu_custom_call.1} parent=87 // pred_fallthru
        _
      // Predicated region
      $region93: #{tpu_custom_call.1} parent=87 // pred_check
        %p590 = pneg %p74
      $region94: #{tpu_custom_call.1} parent=87 // pred_check_branch
        %592 = sbr.rel (%p590) target = $region96
      $region95: #{tpu_custom_call.1} parent=87 // pred_region
        %p593 = scmp.lt.s32.totalorder %s28, 1
        %s594 = scalar_select %p593, %s28, 1
        %s595 = smul.addr %s594, 4
        %s596 = smul.addr %s595, 8
        %s597 = scalar_lea.vmem %s1, %s596
      $region96: #{tpu_custom_call.1} parent=87 // pred_fallthru
        _
    $region88: #{tpu_custom_call.1} parent=5 // pred_fallthru
      _
    %p598 = scmp.le.s32.totalorder 1, %s28
    %p599 = scmp.lt.s32.totalorder %s28, 3
    %p600 = pnand %p598, %p599
    %p601 = pneg %p600
    // Predicated region
    $region97: #{tpu_custom_call.1} parent=5 // pred_check
      _
    $region98: #{tpu_custom_call.1} parent=5 // pred_check_branch
      %603 = sbr.rel (%p600) target = $region100
    $region99: #{tpu_custom_call.1} parent=5 // pred_region
      %s604 = ssub.s32 %s28, 1
      %p605 = scmp.lt.s32.totalorder %s33, 1
      %s606 = scalar_select %p605, %s33, 1
      %s607 = smul.addr %s606, 8
      %s608 = scalar_lea.vmem %s0, %s607
      %p609 = pneg %p54
      %p610 = pneg %p51
      %p611 = scmp.lt.s32.totalorder %s33, 1
      %s612 = scalar_select %p611, %s33, 1
      %s613 = smul.addr %s612, 4
      %s614 = smul.addr %s613, 8
      %s615 = scalar_lea.vmem %s1, %s614
      %p616 = pneg %p80
      %p617 = pneg %p77
      %p618 = pneg %p101
      %p619 = pneg %p98
      %p620 = pneg %p122
      %p621 = pneg %p119
      %p622 = pneg %p143
      %p623 = pneg %p140
      %p624 = pneg %p164
      %p625 = pneg %p161
      %p626 = pneg %p185
      %p627 = pneg %p182
      %p628 = pneg %p206
      %p629 = pneg %p203
      %p630 = pneg %p227
      %p631 = pneg %p224
      %p632 = pneg %p248
      %p633 = pneg %p245
      %p634 = pneg %p269
      %p635 = pneg %p266
      %p636 = pneg %p290
      %p637 = pneg %p287
      %p638 = pneg %p311
      %p639 = pneg %p308
      %p640 = pneg %p332
      %p641 = pneg %p329
      %p642 = pneg %p353
      %p643 = pneg %p350
      %p644 = pneg %p374
      %p645 = pneg %p371
      %p646 = pneg %p395
      %p647 = pneg %p392
      %p648 = pneg %p416
      %p649 = pneg %p413
      %p650 = pneg %p437
      %p651 = pneg %p434
      %p652 = pneg %p458
      %p653 = pneg %p455
      %p654 = pneg %p484
      %p655 = pneg %p481
      %p656 = scmp.lt.s32.totalorder %s33, 1
      %s657 = scalar_select %p656, %s33, 1
      %s658 = smul.addr %s657, 4
      %s659 = smul.addr %s658, 8
      %s660 = scalar_lea.vmem %s20, %s659
      %p661 = pneg %p510
      %p662 = pneg %p507
      %p663 = scmp.lt.s32.totalorder %s33, 1
      %s664 = scalar_select %p663, %s33, 1
      %s665 = smul.addr %s664, 4
      %s666 = smul.addr %s665, 8
      %s667 = scalar_lea.vmem %s21, %s666
      %p668 = scmp.lt.s32.totalorder %s33, 1
      %s669 = scalar_select %p668, %s33, 1
      %s670 = smul.addr %s669, 8
      %s671 = scalar_lea.vmem %s0, %s670
      %p672 = scmp.lt.s32.totalorder %s33, 1
      %s673 = scalar_select %p672, %s33, 1
      %s674 = smul.addr %s673, 4
      %s675 = smul.addr %s674, 8
      %s676 = scalar_lea.vmem %s1, %s675
      %p677 = scmp.lt.s32.totalorder %s33, 1
      %s678 = scalar_select %p677, %s33, 1
      %s679 = smul.addr %s678, 4
      %s680 = smul.addr %s679, 8
      %s681 = scalar_lea.vmem %s20, %s680
      %p682 = scmp.lt.s32.totalorder %s33, 1
      %s683 = scalar_select %p682, %s33, 1
      %s684 = smul.addr %s683, 4
      %s685 = smul.addr %s684, 8
      %s686 = scalar_lea.vmem %s21, %s685
      %v687 = vld [vmem:[%s671] sm:$0xff]
      %v688 = vld [vmem:[%s2] sm:$0xff]
      %v689 = vld [vmem:[%s2 + $0x8] sm:$0xff]
      %v690 = vld [vmem:[%s2 + $0x10] sm:$0xff]
      %v691 = vld [vmem:[%s2 + $0x18] sm:$0xff]
      %v692 = vld [vmem:[%s3] sm:$0xff]
      %v693 = vld [vmem:[%s3 + $0x8] sm:$0xff]
      %v694 = vld [vmem:[%s3 + $0x10] sm:$0xff]
      %v695 = vld [vmem:[%s3 + $0x18] sm:$0xff]
      %697 = vset.pattern.permute.xlu0 0
      %698 = vperm.xlu0 %697, %v692
      %v699 = vpop.permute.xlu0 %698
      %702 = vset.pattern.permute.xlu0 0
      %703 = vperm.xlu0 %702, %v693
      %v704 = vpop.permute.xlu0 %703
      %707 = vset.pattern.permute.xlu0 0
      %708 = vperm.xlu0 %707, %v694
      %v709 = vpop.permute.xlu0 %708
      %712 = vset.pattern.permute.xlu0 0
      %713 = vperm.xlu0 %712, %v695
      %v714 = vpop.permute.xlu0 %713
      %vm716 = vcmask 64512
      %v718 = vsel %vm716, %v688, 0
      %v721 = vsel %vm716, %v689, 0
      %v724 = vsel %vm716, %v690, 0
      %v727 = vsel %vm716, %v691, 0
      %729 = vmatprep.subr.mxu0 0.0
      %730 = vmatpush1.msra.mxu0 %v687
      %731 = vmatprep.subr.mxu0 0.0
      %732 = vmatpush1.msra.mxu0 0.0
      %733 = vmatprep.subr.mxu0 0.0
      %734 = vmatpush1.msra.mxu0 0.0
      %735 = vmatprep.subr.mxu0 0.0
      %736 = vmatpush1.msra.mxu0 0.0
      %737 = vmatprep.subr.mxu0 0.0
      %738 = vmatpush1.msra.mxu0 0.0
      %739 = vmatprep.subr.mxu0 0.0
      %740 = vmatpush1.msra.mxu0 0.0
      %741 = vmatprep.subr.mxu0 0.0
      %742 = vmatpush1.msra.mxu0 0.0
      %743 = vmatprep.subr.mxu0 0.0
      %744 = vmatpush1.msra.mxu0 0.0
      %745 = vmatprep.subr.mxu0 0.0
      %746 = vmatpush1.msra.mxu0 0.0
      %747 = vmatprep.subr.mxu0 0.0
      %748 = vmatpush1.msra.mxu0 0.0
      %749 = vmatprep.subr.mxu0 0.0
      %750 = vmatpush1.msra.mxu0 0.0
      %751 = vmatprep.subr.mxu0 0.0
      %752 = vmatpush1.msra.mxu0 0.0
      %753 = vmatprep.subr.mxu0 0.0
      %754 = vmatpush1.msra.mxu0 0.0
      %755 = vmatprep.subr.mxu0 0.0
      %756 = vmatpush1.msra.mxu0 0.0
      %757 = vmatprep.subr.mxu0 0.0
      %758 = vmatpush1.msra.mxu0 0.0
      %759 = vmatprep.subr.mxu0 0.0
      %760 = vmatpush1.msra.mxu0 0.0
      %761 = vmatprep.subr.mxu0 0.0
      %762 = vmatpush1.msra.mxu0 0.0
      %763 = vmatprep.subr.mxu0 0.0
      %764 = vmatpush1.msra.mxu0 0.0
      %765 = vmatprep.subr.mxu0 0.0
      %766 = vmatpush1.msra.mxu0 0.0
      %767 = vmatprep.subr.mxu0 0.0
      %768 = vmatpush1.msra.mxu0 0.0
      %769 = vmatprep.subr.mxu0 0.0
      %770 = vmatpush1.msra.mxu0 0.0
      %771 = vmatprep.subr.mxu0 0.0
      %772 = vmatpush1.msra.mxu0 0.0
      %773 = vmatprep.subr.mxu0 0.0
      %774 = vmatpush1.msra.mxu0 0.0
      %775 = vmatprep.subr.mxu0 0.0
      %776 = vmatpush1.msra.mxu0 0.0
      %777 = vmatprep.subr.mxu0 0.0
      %778 = vmatpush1.msra.mxu0 0.0
      %779 = vmatprep.subr.mxu0 0.0
      %780 = vmatpush1.msra.mxu0 0.0
      %781 = vmatprep.subr.mxu0 0.0
      %782 = vmatpush1.msra.mxu0 0.0
      %783 = vmatprep.subr.mxu0 0.0
      %784 = vmatpush1.msra.mxu0 0.0
      %785 = vmatprep.subr.mxu0 0.0
      %786 = vmatpush1.msra.mxu0 0.0
      %787 = vmatprep.subr.mxu0 0.0
      %788 = vmatpush1.msra.mxu0 0.0
      %789 = vmatprep.subr.mxu0 0.0
      %790 = vmatpush1.msra.mxu0 0.0
      %791 = vmatprep.subr.mxu0 0.0
      %792 = vmatpush1.msra.mxu0 0.0
      %793 = vmatprep.mubr.f32.mxu0 0.0
      %794 = vmatmul.mubr.f32.gmra.mrb[0].mxu0 %v718
      %v795 = vpop.f32.mrb[0].mxu0
      %v796 = vadd.f32 %v699, %v795
      %v797 = vpop.f32.mrb[0].mxu0
      %798 = vmatprep.mubr.f32.mxu0 0.0
      %799 = vmatmul.mubr.f32.gmra.mrb[0].mxu0 %v721
      %v800 = vpop.f32.mrb[0].mxu0
      %v801 = vadd.f32 %v704, %v800
      %v802 = vpop.f32.mrb[0].mxu0
      %803 = vmatprep.mubr.f32.mxu0 0.0
      %804 = vmatmul.mubr.f32.gmra.mrb[0].mxu0 %v724
      %v805 = vpop.f32.mrb[0].mxu0
      %v806 = vadd.f32 %v709, %v805
      %v807 = vpop.f32.mrb[0].mxu0
      %808 = vmatprep.mubr.f32.mxu0 0.0
      %809 = vmatmul.mubr.f32.gmra.mrb[0].mxu0 %v727
      %v810 = vpop.f32.mrb[0].mxu0
      %v811 = vadd.f32 %v714, %v810
      %v812 = vpop.f32.mrb[0].mxu0
      %813 = vdwg.mxu0
      %vm814 = vcmp.gt.f32.partialorder %v796, 0.0
      %vm815 = vcmp.gt.f32.partialorder %v801, 0.0
      %vm816 = vcmp.gt.f32.partialorder %v806, 0.0
      %vm817 = vcmp.gt.f32.partialorder %v811, 0.0
      %v818 = vmul.f32 %v796, 0.01
      %v819 = vmul.f32 %v801, 0.01
      %v820 = vmul.f32 %v806, 0.01
      %v821 = vmul.f32 %v811, 0.01
      %v822 = vsel %vm814, %v796, %v818
      %v823 = vsel %vm815, %v801, %v819
      %v824 = vsel %vm816, %v806, %v820
      %v825 = vsel %vm817, %v811, %v821
      %826 = vxpose.xlu0.b32.start [1/16] %v822, 128
      %827 = vxpose.xlu0.b32.cont [2/16] %v823, 128
      %828 = vxpose.xlu0.b32.cont [3/16] %v824, 128
      %829 = vxpose.xlu0.b32.cont [4/16] %v825, 128
      %830 = vxpose.xlu0.b32.cont [5/16] 0.0, 128
      %831 = vxpose.xlu0.b32.cont [6/16] 0.0, 128
      %832 = vxpose.xlu0.b32.cont [7/16] 0.0, 128
      %833 = vxpose.xlu0.b32.cont [8/16] 0.0, 128
      %834 = vxpose.xlu0.b32.cont [9/16] 0.0, 128
      %835 = vxpose.xlu0.b32.cont [10/16] 0.0, 128
      %836 = vxpose.xlu0.b32.cont [11/16] 0.0, 128
      %837 = vxpose.xlu0.b32.cont [12/16] 0.0, 128
      %838 = vxpose.xlu0.b32.cont [13/16] 0.0, 128
      %839 = vxpose.xlu0.b32.cont [14/16] 0.0, 128
      %840 = vxpose.xlu0.b32.cont [15/16] 0.0, 128
      %841 = vxpose.xlu0.b32.end [16/16] 0.0, 128
      %v842 = vpop.trf.xlu0
      %v843 = vpop.trf.xlu0
      %v844 = vpop.trf.xlu0
      %v845 = vpop.trf.xlu0
      %v846 = vpop.trf.xlu0
      %v847 = vpop.trf.xlu0
      %v848 = vpop.trf.xlu0
      %v849 = vpop.trf.xlu0
      %v850 = vpop.trf.xlu0
      %v851 = vpop.trf.xlu0
      %v852 = vpop.trf.xlu0
      %v853 = vpop.trf.xlu0
      %v854 = vpop.trf.xlu0
      %v855 = vpop.trf.xlu0
      %v856 = vpop.trf.xlu0
      %v857 = vpop.trf.xlu0
      %v858 = vld [vmem:[%s4] sm:$0xff]
      %v859 = vld [vmem:[%s4 + $0x8] sm:$0xff]
      %v860 = vld [vmem:[%s4 + $0x10] sm:$0xff]
      %v861 = vld [vmem:[%s4 + $0x18] sm:$0xff]
      %vm862 = vcmask 261120
      %v864 = vsel %vm862, %v842, 0
      %v867 = vsel %vm862, %v843, 0
      %869 = vmatprep.subr.mxu0 0.0
      %870 = vmatpush1.msra.mxu0 %v858
      %871 = vmatprep.subr.mxu0 0.0
      %872 = vmatpush1.msra.mxu0 %v859
      %873 = vmatprep.subr.mxu0 0.0
      %874 = vmatpush1.msra.mxu0 %v860
      %875 = vmatprep.subr.mxu0 0.0
      %876 = vmatpush1.msra.mxu0 %v861
      %877 = vmatprep.subr.mxu0 0.0
      %878 = vmatpush1.msra.mxu0 0.0
      %879 = vmatprep.subr.mxu0 0.0
      %880 = vmatpush1.msra.mxu0 0.0
      %881 = vmatprep.subr.mxu0 0.0
      %882 = vmatpush1.msra.mxu0 0.0
      %883 = vmatprep.subr.mxu0 0.0
      %884 = vmatpush1.msra.mxu0 0.0
      %885 = vmatprep.subr.mxu0 0.0
      %886 = vmatpush1.msra.mxu0 0.0
      %887 = vmatprep.subr.mxu0 0.0
      %888 = vmatpush1.msra.mxu0 0.0
      %889 = vmatprep.subr.mxu0 0.0
      %890 = vmatpush1.msra.mxu0 0.0
      %891 = vmatprep.subr.mxu0 0.0
      %892 = vmatpush1.msra.mxu0 0.0
      %893 = vmatprep.subr.mxu0 0.0
      %894 = vmatpush1.msra.mxu0 0.0
      %895 = vmatprep.subr.mxu0 0.0
      %896 = vmatpush1.msra.mxu0 0.0
      %897 = vmatprep.subr.mxu0 0.0
      %898 = vmatpush1.msra.mxu0 0.0
      %899 = vmatprep.subr.mxu0 0.0
      %900 = vmatpush1.msra.mxu0 0.0
      %901 = vmatprep.subr.mxu0 0.0
      %902 = vmatpush1.msra.mxu0 0.0
      %903 = vmatprep.subr.mxu0 0.0
      %904 = vmatpush1.msra.mxu0 0.0
      %905 = vmatprep.subr.mxu0 0.0
      %906 = vmatpush1.msra.mxu0 0.0
      %907 = vmatprep.subr.mxu0 0.0
      %908 = vmatpush1.msra.mxu0 0.0
      %909 = vmatprep.subr.mxu0 0.0
      %910 = vmatpush1.msra.mxu0 0.0
      %911 = vmatprep.subr.mxu0 0.0
      %912 = vmatpush1.msra.mxu0 0.0
      %913 = vmatprep.subr.mxu0 0.0
      %914 = vmatpush1.msra.mxu0 0.0
      %915 = vmatprep.subr.mxu0 0.0
      %916 = vmatpush1.msra.mxu0 0.0
      %917 = vmatprep.subr.mxu0 0.0
      %918 = vmatpush1.msra.mxu0 0.0
      %919 = vmatprep.subr.mxu0 0.0
      %920 = vmatpush1.msra.mxu0 0.0
      %921 = vmatprep.subr.mxu0 0.0
      %922 = vmatpush1.msra.mxu0 0.0
      %923 = vmatprep.subr.mxu0 0.0
      %924 = vmatpush1.msra.mxu0 0.0
      %925 = vmatprep.subr.mxu0 0.0
      %926 = vmatpush1.msra.mxu0 0.0
      %927 = vmatprep.subr.mxu0 0.0
      %928 = vmatpush1.msra.mxu0 0.0
      %929 = vmatprep.subr.mxu0 0.0
      %930 = vmatpush1.msra.mxu0 0.0
      %931 = vmatprep.subr.mxu0 0.0
      %932 = vmatpush1.msra.mxu0 0.0
      %933 = vmatprep.mubr.f32.mxu0 0.0
      %934 = vmatmul.mubr.f32.gmra.mrb[0].mxu0 %v864
      %v935 = vpop.f32.mrb[0].mxu0
      %v936 = vadd.f32 0.0, %v935
      %v937 = vpop.f32.mrb[0].mxu0
      %938 = vmatprep.mubr.f32.mxu0 0.0
      %939 = vmatmul.mubr.f32.gmra.mrb[0].mxu0 %v867
      %v940 = vpop.f32.mrb[0].mxu0
      %v941 = vadd.f32 0.0, %v940
      %v942 = vpop.f32.mrb[0].mxu0
      %943 = vdwg.mxu0
      %v944 = vld [vmem:[%s5] sm:$0xff]
      %v945 = vld [vmem:[%s5 + $0x8] sm:$0xff]
      %v946 = vld [vmem:[%s5 + $0x10] sm:$0xff]
      %v947 = vld [vmem:[%s5 + $0x18] sm:$0xff]
      %v949 = vsel %vm862, %v936, 0
      %v952 = vsel %vm862, %v941, 0
      %954 = vmatprep.subr.mxu0 0.0
      %955 = vmatpush1.msra.mxu0 %v944
      %956 = vmatprep.subr.mxu0 0.0
      %957 = vmatpush1.msra.mxu0 %v945
      %958 = vmatprep.subr.mxu0 0.0
      %959 = vmatpush1.msra.mxu0 %v946
      %960 = vmatprep.subr.mxu0 0.0
      %961 = vmatpush1.msra.mxu0 %v947
      %962 = vmatprep.subr.mxu0 0.0
      %963 = vmatpush1.msra.mxu0 0.0
      %964 = vmatprep.subr.mxu0 0.0
      %965 = vmatpush1.msra.mxu0 0.0
      %966 = vmatprep.subr.mxu0 0.0
      %967 = vmatpush1.msra.mxu0 0.0
      %968 = vmatprep.subr.mxu0 0.0
      %969 = vmatpush1.msra.mxu0 0.0
      %970 = vmatprep.subr.mxu0 0.0
      %971 = vmatpush1.msra.mxu0 0.0
      %972 = vmatprep.subr.mxu0 0.0
      %973 = vmatpush1.msra.mxu0 0.0
      %974 = vmatprep.subr.mxu0 0.0
      %975 = vmatpush1.msra.mxu0 0.0
      %976 = vmatprep.subr.mxu0 0.0
      %977 = vmatpush1.msra.mxu0 0.0
      %978 = vmatprep.subr.mxu0 0.0
      %979 = vmatpush1.msra.mxu0 0.0
      %980 = vmatprep.subr.mxu0 0.0
      %981 = vmatpush1.msra.mxu0 0.0
      %982 = vmatprep.subr.mxu0 0.0
      %983 = vmatpush1.msra.mxu0 0.0
      %984 = vmatprep.subr.mxu0 0.0
      %985 = vmatpush1.msra.mxu0 0.0
      %986 = vmatprep.subr.mxu0 0.0
      %987 = vmatpush1.msra.mxu0 0.0
      %988 = vmatprep.subr.mxu0 0.0
      %989 = vmatpush1.msra.mxu0 0.0
      %990 = vmatprep.subr.mxu0 0.0
      %991 = vmatpush1.msra.mxu0 0.0
      %992 = vmatprep.subr.mxu0 0.0
      %993 = vmatpush1.msra.mxu0 0.0
      %994 = vmatprep.subr.mxu0 0.0
      %995 = vmatpush1.msra.mxu0 0.0
      %996 = vmatprep.subr.mxu0 0.0
      %997 = vmatpush1.msra.mxu0 0.0
      %998 = vmatprep.subr.mxu0 0.0
      %999 = vmatpush1.msra.mxu0 0.0
      %1000 = vmatprep.subr.mxu0 0.0
      %1001 = vmatpush1.msra.mxu0 0.0
      %1002 = vmatprep.subr.mxu0 0.0
      %1003 = vmatpush1.msra.mxu0 0.0
      %1004 = vmatprep.subr.mxu0 0.0
      %1005 = vmatpush1.msra.mxu0 0.0
      %1006 = vmatprep.subr.mxu0 0.0
      %1007 = vmatpush1.msra.mxu0 0.0
      %1008 = vmatprep.subr.mxu0 0.0
      %1009 = vmatpush1.msra.mxu0 0.0
      %1010 = vmatprep.subr.mxu0 0.0
      %1011 = vmatpush1.msra.mxu0 0.0
      %1012 = vmatprep.subr.mxu0 0.0
      %1013 = vmatpush1.msra.mxu0 0.0
      %1014 = vmatprep.subr.mxu0 0.0
      %1015 = vmatpush1.msra.mxu0 0.0
      %1016 = vmatprep.subr.mxu0 0.0
      %1017 = vmatpush1.msra.mxu0 0.0
      %1018 = vmatprep.mubr.f32.mxu0 0.0
      %1019 = vmatmul.mubr.f32.gmra.mrb[0].mxu0 %v949
      %v1020 = vpop.f32.mrb[0].mxu0
      %v1021 = vadd.f32 0.0, %v1020
      %v1022 = vpop.f32.mrb[0].mxu0
      %1023 = vmatprep.mubr.f32.mxu0 0.0
      %1024 = vmatmul.mubr.f32.gmra.mrb[0].mxu0 %v952
      %v1025 = vpop.f32.mrb[0].mxu0
      %v1026 = vadd.f32 0.0, %v1025
      %v1027 = vpop.f32.mrb[0].mxu0
      %1028 = vdwg.mxu0
      %1031 = vrot.lane.b32.xlu0 %v1021, 127
      %v1032 = vpop.permute.xlu0 %1031
      %1033 = vrot.lane.b32.xlu0 %v1026, 127
      %v1034 = vpop.permute.xlu0 %1033
      %1037 = vxpose.xlu0.b32.start [1/16] %v1032, 128
      %1038 = vxpose.xlu0.b32.cont [2/16] %v1034, 128
      %1039 = vxpose.xlu0.b32.cont [3/16] 0.0, 128
      %1040 = vxpose.xlu0.b32.cont [4/16] 0.0, 128
      %1041 = vxpose.xlu0.b32.cont [5/16] 0.0, 128
      %1042 = vxpose.xlu0.b32.cont [6/16] 0.0, 128
      %1043 = vxpose.xlu0.b32.cont [7/16] 0.0, 128
      %1044 = vxpose.xlu0.b32.cont [8/16] 0.0, 128
      %1045 = vxpose.xlu0.b32.cont [9/16] 0.0, 128
      %1046 = vxpose.xlu0.b32.cont [10/16] 0.0, 128
      %1047 = vxpose.xlu0.b32.cont [11/16] 0.0, 128
      %1048 = vxpose.xlu0.b32.cont [12/16] 0.0, 128
      %1049 = vxpose.xlu0.b32.cont [13/16] 0.0, 128
      %1050 = vxpose.xlu0.b32.cont [14/16] 0.0, 128
      %1051 = vxpose.xlu0.b32.cont [15/16] 0.0, 128
      %1052 = vxpose.xlu0.b32.end [16/16] 0.0, 128
      %v1053 = vpop.trf.xlu0
      %v1054 = vpop.trf.xlu0
      %v1055 = vpop.trf.xlu0
      %v1056 = vpop.trf.xlu0
      %v1057 = vpop.trf.xlu0
      %v1058 = vpop.trf.xlu0
      %v1059 = vpop.trf.xlu0
      %v1060 = vpop.trf.xlu0
      %v1061 = vpop.trf.xlu0
      %v1062 = vpop.trf.xlu0
      %v1063 = vpop.trf.xlu0
      %v1064 = vpop.trf.xlu0
      %v1065 = vpop.trf.xlu0
      %v1066 = vpop.trf.xlu0
      %v1067 = vpop.trf.xlu0
      %v1068 = vpop.trf.xlu0
      %1069 = vset.pattern.permute.xlu0 0
      %1070 = vperm.xlu0 %1069, %v1021
      %v1071 = vpop.permute.xlu0 %1070
      %1073 = vset.pattern.permute.xlu0 0
      %1074 = vperm.xlu0 %1073, %v1026
      %v1075 = vpop.permute.xlu0 %1074
      %v1077 = vlaneseq
      %v1078 = vshrl.u32 %v1077, 7
      %v1079 = vsub.s32 0, %v1078
      %v1080 = vrot.slane %v1053, %v1079
      %v1081 = vadd.f32 %v1071, %v1080
      %v1082 = vadd.f32 %v1075, %v1080
      %vm1083 = vcmp.gt.f32.partialorder %v1081, 0.0
      %vm1084 = vcmp.gt.f32.partialorder %v1082, 0.0
      %v1085 = vmul.f32 %v1081, 0.01
      %v1086 = vmul.f32 %v1082, 0.01
      %v1087 = vsel %vm1083, %v1081, %v1085
      %v1088 = vsel %vm1084, %v1082, %v1086
      %v1089 = vld [vmem:[%s6] sm:$0xff]
      %v1090 = vld [vmem:[%s6 + $0x8] sm:$0xff]
      %vm1091 = vcmp.gt.f32.partialorder %v1089, 0.0
      %vm1092 = vcmp.gt.f32.partialorder %v1090, 0.0
      %v1093 = vsel %vm1091, %v1087, -1e+12
      %v1094 = vsel %vm1092, %v1088, -1e+12
      %vm1095 = vcmask 130048
      %v1096 = vsel %vm1095, %v1093, -inf
      %1097 = vmax.xlane.f32.xlu0 %v1096
      %v1098 = vpop.xlane.xlu0 %1097
      %v1099 = vsel %vm1095, %v1094, -inf
      %1100 = vmax.xlane.f32.xlu0 %v1099
      %v1101 = vpop.xlane.xlu0 %1100
      %v1102 = vsub.f32 %v1093, %v1098
      %v1103 = vsub.f32 %v1094, %v1101
      %v1104 = vmul.f32 %v1102, 1.442695
      %v1105 = vpow.pop %v1104
      %v1106 = vmul.f32 %v1103, 1.442695
      %v1107 = vpow.pop %v1106
      %v1108 = vsel %vm1095, %v1105, 0.0
      %1109 = vadd.xlane.f32.xlu0 %v1108
      %v1110 = vpop.xlane.xlu0 %1109
      %v1111 = vsel %vm1095, %v1107, 0.0
      %1112 = vadd.xlane.f32.xlu0 %v1111
      %v1113 = vpop.xlane.xlu0 %1112
      %v1114 = vrcp.pop %v1110
      %v1115 = vrcp.pop %v1113
      %v1116 = vmul.f32 %v1105, %v1114
      %v1117 = vmul.f32 %v1107, %v1115
      %v1119 = vsel %vm1095, %v1116, 0
      %v1122 = vsel %vm1095, %v1117, 0
      %1124 = vmatprep.subr.mxu0 0.0
      %1125 = vmatpush1.msra.mxu0 %v936
      %1126 = vmatprep.subr.mxu0 0.0
      %1127 = vmatpush1.msra.mxu0 %v941
      %1128 = vmatprep.subr.mxu0 0.0
      %1129 = vmatpush1.msra.mxu0 0.0
      %1130 = vmatprep.subr.mxu0 0.0
      %1131 = vmatpush1.msra.mxu0 0.0
      %1132 = vmatprep.subr.mxu0 0.0
      %1133 = vmatpush1.msra.mxu0 0.0
      %1134 = vmatprep.subr.mxu0 0.0
      %1135 = vmatpush1.msra.mxu0 0.0
      %1136 = vmatprep.subr.mxu0 0.0
      %1137 = vmatpush1.msra.mxu0 0.0
      %1138 = vmatprep.subr.mxu0 0.0
      %1139 = vmatpush1.msra.mxu0 0.0
      %1140 = vmatprep.subr.mxu0 0.0
      %1141 = vmatpush1.msra.mxu0 0.0
      %1142 = vmatprep.subr.mxu0 0.0
      %1143 = vmatpush1.msra.mxu0 0.0
      %1144 = vmatprep.subr.mxu0 0.0
      %1145 = vmatpush1.msra.mxu0 0.0
      %1146 = vmatprep.subr.mxu0 0.0
      %1147 = vmatpush1.msra.mxu0 0.0
      %1148 = vmatprep.subr.mxu0 0.0
      %1149 = vmatpush1.msra.mxu0 0.0
      %1150 = vmatprep.subr.mxu0 0.0
      %1151 = vmatpush1.msra.mxu0 0.0
      %1152 = vmatprep.subr.mxu0 0.0
      %1153 = vmatpush1.msra.mxu0 0.0
      %1154 = vmatprep.subr.mxu0 0.0
      %1155 = vmatpush1.msra.mxu0 0.0
      %1156 = vmatprep.subr.mxu0 0.0
      %1157 = vmatpush1.msra.mxu0 0.0
      %1158 = vmatprep.subr.mxu0 0.0
      %1159 = vmatpush1.msra.mxu0 0.0
      %1160 = vmatprep.subr.mxu0 0.0
      %1161 = vmatpush1.msra.mxu0 0.0
      %1162 = vmatprep.subr.mxu0 0.0
      %1163 = vmatpush1.msra.mxu0 0.0
      %1164 = vmatprep.subr.mxu0 0.0
      %1165 = vmatpush1.msra.mxu0 0.0
      %1166 = vmatprep.subr.mxu0 0.0
      %1167 = vmatpush1.msra.mxu0 0.0
      %1168 = vmatprep.subr.mxu0 0.0
      %1169 = vmatpush1.msra.mxu0 0.0
      %1170 = vmatprep.subr.mxu0 0.0
      %1171 = vmatpush1.msra.mxu0 0.0
      %1172 = vmatprep.subr.mxu0 0.0
      %1173 = vmatpush1.msra.mxu0 0.0
      %1174 = vmatprep.subr.mxu0 0.0
      %1175 = vmatpush1.msra.mxu0 0.0
      %1176 = vmatprep.subr.mxu0 0.0
      %1177 = vmatpush1.msra.mxu0 0.0
      %1178 = vmatprep.subr.mxu0 0.0
      %1179 = vmatpush1.msra.mxu0 0.0
      %1180 = vmatprep.subr.mxu0 0.0
      %1181 = vmatpush1.msra.mxu0 0.0
      %1182 = vmatprep.subr.mxu0 0.0
      %1183 = vmatpush1.msra.mxu0 0.0
      %1184 = vmatprep.subr.mxu0 0.0
      %1185 = vmatpush1.msra.mxu0 0.0
      %1186 = vmatprep.subr.mxu0 0.0
      %1187 = vmatpush1.msra.mxu0 0.0
      %1188 = vmatprep.mubr.f32.mxu0 0.0
      %1189 = vmatmul.mubr.f32.gmra.mrb[0].mxu0 %v1119
      %v1190 = vpop.f32.mrb[0].mxu0
      %v1191 = vadd.f32 0.0, %v1190
      %v1192 = vpop.f32.mrb[0].mxu0
      %1193 = vmatprep.mubr.f32.mxu0 0.0
      %1194 = vmatmul.mubr.f32.gmra.mrb[0].mxu0 %v1122
      %v1195 = vpop.f32.mrb[0].mxu0
      %v1196 = vadd.f32 0.0, %v1195
      %v1197 = vpop.f32.mrb[0].mxu0
      %1198 = vdwg.mxu0
      %v1199 = vmax.f32 %v1191, 0.0
      %v1200 = vmax.f32 %v1196, 0.0
      %v1201 = vld [vmem:[%s7] sm:$0xff]
      %v1202 = vld [vmem:[%s7 + $0x8] sm:$0xff]
      %v1203 = vld [vmem:[%s8] sm:$0xff]
      %v1204 = vld [vmem:[%s8 + $0x8] sm:$0xff]
      %1206 = vset.pattern.permute.xlu0 0
      %1207 = vperm.xlu0 %1206, %v1203
      %v1208 = vpop.permute.xlu0 %1207
      %1211 = vset.pattern.permute.xlu0 0
      %1212 = vperm.xlu0 %1211, %v1204
      %v1213 = vpop.permute.xlu0 %1212
      %v1216 = vsel %vm1095, %v1201, 0
      %v1219 = vsel %vm1095, %v1202, 0
      %1221 = vmatprep.subr.mxu0 0.0
      %1222 = vmatpush1.msra.mxu0 %v1199
      %1223 = vmatprep.subr.mxu0 0.0
      %1224 = vmatpush1.msra.mxu0 %v1200
      %1225 = vmatprep.subr.mxu0 0.0
      %1226 = vmatpush1.msra.mxu0 0.0
      %1227 = vmatprep.subr.mxu0 0.0
      %1228 = vmatpush1.msra.mxu0 0.0
      %1229 = vmatprep.subr.mxu0 0.0
      %1230 = vmatpush1.msra.mxu0 0.0
      %1231 = vmatprep.subr.mxu0 0.0
      %1232 = vmatpush1.msra.mxu0 0.0
      %1233 = vmatprep.subr.mxu0 0.0
      %1234 = vmatpush1.msra.mxu0 0.0
      %1235 = vmatprep.subr.mxu0 0.0
      %1236 = vmatpush1.msra.mxu0 0.0
      %1237 = vmatprep.subr.mxu0 0.0
      %1238 = vmatpush1.msra.mxu0 0.0
      %1239 = vmatprep.subr.mxu0 0.0
      %1240 = vmatpush1.msra.mxu0 0.0
      %1241 = vmatprep.subr.mxu0 0.0
      %1242 = vmatpush1.msra.mxu0 0.0
      %1243 = vmatprep.subr.mxu0 0.0
      %1244 = vmatpush1.msra.mxu0 0.0
      %1245 = vmatprep.subr.mxu0 0.0
      %1246 = vmatpush1.msra.mxu0 0.0
      %1247 = vmatprep.subr.mxu0 0.0
      %1248 = vmatpush1.msra.mxu0 0.0
      %1249 = vmatprep.subr.mxu0 0.0
      %1250 = vmatpush1.msra.mxu0 0.0
      %1251 = vmatprep.subr.mxu0 0.0
      %1252 = vmatpush1.msra.mxu0 0.0
      %1253 = vmatprep.subr.mxu0 0.0
      %1254 = vmatpush1.msra.mxu0 0.0
      %1255 = vmatprep.subr.mxu0 0.0
      %1256 = vmatpush1.msra.mxu0 0.0
      %1257 = vmatprep.subr.mxu0 0.0
      %1258 = vmatpush1.msra.mxu0 0.0
      %1259 = vmatprep.subr.mxu0 0.0
      %1260 = vmatpush1.msra.mxu0 0.0
      %1261 = vmatprep.subr.mxu0 0.0
      %1262 = vmatpush1.msra.mxu0 0.0
      %1263 = vmatprep.subr.mxu0 0.0
      %1264 = vmatpush1.msra.mxu0 0.0
      %1265 = vmatprep.subr.mxu0 0.0
      %1266 = vmatpush1.msra.mxu0 0.0
      %1267 = vmatprep.subr.mxu0 0.0
      %1268 = vmatpush1.msra.mxu0 0.0
      %1269 = vmatprep.subr.mxu0 0.0
      %1270 = vmatpush1.msra.mxu0 0.0
      %1271 = vmatprep.subr.mxu0 0.0
      %1272 = vmatpush1.msra.mxu0 0.0
      %1273 = vmatprep.subr.mxu0 0.0
      %1274 = vmatpush1.msra.mxu0 0.0
      %1275 = vmatprep.subr.mxu0 0.0
      %1276 = vmatpush1.msra.mxu0 0.0
      %1277 = vmatprep.subr.mxu0 0.0
      %1278 = vmatpush1.msra.mxu0 0.0
      %1279 = vmatprep.subr.mxu0 0.0
      %1280 = vmatpush1.msra.mxu0 0.0
      %1281 = vmatprep.subr.mxu0 0.0
      %1282 = vmatpush1.msra.mxu0 0.0
      %1283 = vmatprep.subr.mxu0 0.0
      %1284 = vmatpush1.msra.mxu0 0.0
      %1285 = vmatprep.mubr.f32.mxu0 0.0
      %1286 = vmatmul.mubr.f32.gmra.mrb[0].mxu0 %v1216
      %v1287 = vpop.f32.mrb[0].mxu0
      %v1288 = vadd.f32 %v1208, %v1287
      %v1289 = vpop.f32.mrb[0].mxu0
      %1290 = vmatprep.mubr.f32.mxu0 0.0
      %1291 = vmatmul.mubr.f32.gmra.mrb[0].mxu0 %v1219
      %v1292 = vpop.f32.mrb[0].mxu0
      %v1293 = vadd.f32 %v1213, %v1292
      %v1294 = vpop.f32.mrb[0].mxu0
      %1295 = vdwg.mxu0
      %v1296 = vld [vmem:[%s9] sm:$0xff]
      %v1297 = vld [vmem:[%s9 + $0x8] sm:$0xff]
      %v1298 = vld [vmem:[%s9 + $0x10] sm:$0xff]
      %v1299 = vld [vmem:[%s9 + $0x18] sm:$0xff]
      %v1300 = vld [vmem:[%s10] sm:$0xff]
      %v1301 = vld [vmem:[%s10 + $0x8] sm:$0xff]
      %v1303 = vsel %vm862, %v1288, 0
      %v1306 = vsel %vm862, %v1293, 0
      %1308 = vmatprep.subr.mxu0 0.0
      %1309 = vmatpush1.msra.mxu0 %v1296
      %1310 = vmatprep.subr.mxu0 0.0
      %1311 = vmatpush1.msra.mxu0 %v1297
      %1312 = vmatprep.subr.mxu0 0.0
      %1313 = vmatpush1.msra.mxu0 %v1298
      %1314 = vmatprep.subr.mxu0 0.0
      %1315 = vmatpush1.msra.mxu0 %v1299
      %1316 = vmatprep.subr.mxu0 0.0
      %1317 = vmatpush1.msra.mxu0 0.0
      %1318 = vmatprep.subr.mxu0 0.0
      %1319 = vmatpush1.msra.mxu0 0.0
      %1320 = vmatprep.subr.mxu0 0.0
      %1321 = vmatpush1.msra.mxu0 0.0
      %1322 = vmatprep.subr.mxu0 0.0
      %1323 = vmatpush1.msra.mxu0 0.0
      %1324 = vmatprep.subr.mxu0 0.0
      %1325 = vmatpush1.msra.mxu0 0.0
      %1326 = vmatprep.subr.mxu0 0.0
      %1327 = vmatpush1.msra.mxu0 0.0
      %1328 = vmatprep.subr.mxu0 0.0
      %1329 = vmatpush1.msra.mxu0 0.0
      %1330 = vmatprep.subr.mxu0 0.0
      %1331 = vmatpush1.msra.mxu0 0.0
      %1332 = vmatprep.subr.mxu0 0.0
      %1333 = vmatpush1.msra.mxu0 0.0
      %1334 = vmatprep.subr.mxu0 0.0
      %1335 = vmatpush1.msra.mxu0 0.0
      %1336 = vmatprep.subr.mxu0 0.0
      %1337 = vmatpush1.msra.mxu0 0.0
      %1338 = vmatprep.subr.mxu0 0.0
      %1339 = vmatpush1.msra.mxu0 0.0
      %1340 = vmatprep.subr.mxu0 0.0
      %1341 = vmatpush1.msra.mxu0 0.0
      %1342 = vmatprep.subr.mxu0 0.0
      %1343 = vmatpush1.msra.mxu0 0.0
      %1344 = vmatprep.subr.mxu0 0.0
      %1345 = vmatpush1.msra.mxu0 0.0
      %1346 = vmatprep.subr.mxu0 0.0
      %1347 = vmatpush1.msra.mxu0 0.0
      %1348 = vmatprep.subr.mxu0 0.0
      %1349 = vmatpush1.msra.mxu0 0.0
      %1350 = vmatprep.subr.mxu0 0.0
      %1351 = vmatpush1.msra.mxu0 0.0
      %1352 = vmatprep.subr.mxu0 0.0
      %1353 = vmatpush1.msra.mxu0 0.0
      %1354 = vmatprep.subr.mxu0 0.0
      %1355 = vmatpush1.msra.mxu0 0.0
      %1356 = vmatprep.subr.mxu0 0.0
      %1357 = vmatpush1.msra.mxu0 0.0
      %1358 = vmatprep.subr.mxu0 0.0
      %1359 = vmatpush1.msra.mxu0 0.0
      %1360 = vmatprep.subr.mxu0 0.0
      %1361 = vmatpush1.msra.mxu0 0.0
      %1362 = vmatprep.subr.mxu0 0.0
      %1363 = vmatpush1.msra.mxu0 0.0
      %1364 = vmatprep.subr.mxu0 0.0
      %1365 = vmatpush1.msra.mxu0 0.0
      %1366 = vmatprep.subr.mxu0 0.0
      %1367 = vmatpush1.msra.mxu0 0.0
      %1368 = vmatprep.subr.mxu0 0.0
      %1369 = vmatpush1.msra.mxu0 0.0
      %1370 = vmatprep.subr.mxu0 0.0
      %1371 = vmatpush1.msra.mxu0 0.0
      %1372 = vmatprep.mubr.f32.mxu0 0.0
      %1373 = vmatmul.mubr.f32.gmra.mrb[0].mxu0 %v1303
      %v1374 = vpop.f32.mrb[0].mxu0
      %v1375 = vadd.f32 %v1300, %v1374
      %v1376 = vpop.f32.mrb[0].mxu0
      %1377 = vmatprep.mubr.f32.mxu0 0.0
      %1378 = vmatmul.mubr.f32.gmra.mrb[0].mxu0 %v1306
      %v1379 = vpop.f32.mrb[0].mxu0
      %v1380 = vadd.f32 %v1301, %v1379
      %v1381 = vpop.f32.mrb[0].mxu0
      %1382 = vdwg.mxu0
      %vm1383 = vcmask 523264
      %v1385 = vsel %vm1383, %v1375, 0
      %v1388 = vsel %vm1383, %v1380, 0
      %1390 = vmatprep.subr.mxu0 0.0
      %1391 = vmatpush1.xpose.msra.mxu0 %v1385
      %1392 = vmatprep.subr.mxu0 0.0
      %1393 = vmatpush1.xpose.msra.mxu0 %v1388
      %1394 = vmatprep.subr.mxu0 0.0
      %1395 = vmatpush1.xpose.msra.mxu0 0.0
      %1396 = vmatprep.subr.mxu0 0.0
      %1397 = vmatpush1.xpose.msra.mxu0 0.0
      %1398 = vmatprep.subr.mxu0 0.0
      %1399 = vmatpush1.xpose.msra.mxu0 0.0
      %1400 = vmatprep.subr.mxu0 0.0
      %1401 = vmatpush1.xpose.msra.mxu0 0.0
      %1402 = vmatprep.subr.mxu0 0.0
      %1403 = vmatpush1.xpose.msra.mxu0 0.0
      %1404 = vmatprep.subr.mxu0 0.0
      %1405 = vmatpush1.xpose.msra.mxu0 0.0
      %1406 = vmatprep.subr.mxu0 0.0
      %1407 = vmatpush1.xpose.msra.mxu0 0.0
      %1408 = vmatprep.subr.mxu0 0.0
      %1409 = vmatpush1.xpose.msra.mxu0 0.0
      %1410 = vmatprep.subr.mxu0 0.0
      %1411 = vmatpush1.xpose.msra.mxu0 0.0
      %1412 = vmatprep.subr.mxu0 0.0
      %1413 = vmatpush1.xpose.msra.mxu0 0.0
      %1414 = vmatprep.subr.mxu0 0.0
      %1415 = vmatpush1.xpose.msra.mxu0 0.0
      %1416 = vmatprep.subr.mxu0 0.0
      %1417 = vmatpush1.xpose.msra.mxu0 0.0
      %1418 = vmatprep.subr.mxu0 0.0
      %1419 = vmatpush1.xpose.msra.mxu0 0.0
      %1420 = vmatprep.subr.mxu0 0.0
      %1421 = vmatpush1.xpose.msra.mxu0 0.0
      %1422 = vmatprep.subr.mxu0 0.0
      %1423 = vmatpush1.xpose.msra.mxu0 0.0
      %1424 = vmatprep.subr.mxu0 0.0
      %1425 = vmatpush1.xpose.msra.mxu0 0.0
      %1426 = vmatprep.subr.mxu0 0.0
      %1427 = vmatpush1.xpose.msra.mxu0 0.0
      %1428 = vmatprep.subr.mxu0 0.0
      %1429 = vmatpush1.xpose.msra.mxu0 0.0
      %1430 = vmatprep.subr.mxu0 0.0
      %1431 = vmatpush1.xpose.msra.mxu0 0.0
      %1432 = vmatprep.subr.mxu0 0.0
      %1433 = vmatpush1.xpose.msra.mxu0 0.0
      %1434 = vmatprep.subr.mxu0 0.0
      %1435 = vmatpush1.xpose.msra.mxu0 0.0
      %1436 = vmatprep.subr.mxu0 0.0
      %1437 = vmatpush1.xpose.msra.mxu0 0.0
      %1438 = vmatprep.subr.mxu0 0.0
      %1439 = vmatpush1.xpose.msra.mxu0 0.0
      %1440 = vmatprep.subr.mxu0 0.0
      %1441 = vmatpush1.xpose.msra.mxu0 0.0
      %1442 = vmatprep.subr.mxu0 0.0
      %1443 = vmatpush1.xpose.msra.mxu0 0.0
      %1444 = vmatprep.subr.mxu0 0.0
      %1445 = vmatpush1.xpose.msra.mxu0 0.0
      %1446 = vmatprep.subr.mxu0 0.0
      %1447 = vmatpush1.xpose.msra.mxu0 0.0
      %1448 = vmatprep.subr.mxu0 0.0
      %1449 = vmatpush1.xpose.msra.mxu0 0.0
      %1450 = vmatprep.subr.mxu0 0.0
      %1451 = vmatpush1.xpose.msra.mxu0 0.0
      %1452 = vmatprep.subr.mxu0 0.0
      %1453 = vmatpush1.xpose.msra.mxu0 0.0
      %1454 = vmatprep.mubr.f32.mxu0 0.0
      %1455 = vmatmul.mubr.f32.gmra.mrb[0].mxu0 %v1385
      %v1456 = vpop.f32.mrb[0].mxu0
      %v1457 = vadd.f32 0.0, %v1456
      %v1458 = vpop.f32.mrb[0].mxu0
      %1459 = vmatprep.mubr.f32.mxu0 0.0
      %1460 = vmatmul.mubr.f32.gmra.mrb[0].mxu0 %v1388
      %v1461 = vpop.f32.mrb[0].mxu0
      %v1462 = vadd.f32 0.0, %v1461
      %v1463 = vpop.f32.mrb[0].mxu0
      %1464 = vdwg.mxu0
      %v1465 = vmax.f32 %v1457, 0.0
      %v1466 = vmax.f32 %v1462, 0.0
      %v1467 = vsel %vm1095, %v1465, -inf
      %1468 = vmax.xlane.f32.xlu0 %v1467
      %v1469 = vpop.xlane.xlu0 %1468
      %v1470 = vsel %vm1095, %v1466, -inf
      %1471 = vmax.xlane.f32.xlu0 %v1470
      %v1472 = vpop.xlane.xlu0 %1471
      %v1473 = vsub.f32 %v1465, %v1469
      %v1474 = vsub.f32 %v1466, %v1472
      %v1475 = vmul.f32 %v1473, 1.442695
      %v1476 = vpow.pop %v1475
      %v1477 = vmul.f32 %v1474, 1.442695
      %v1478 = vpow.pop %v1477
      %v1479 = vsel %vm1095, %v1476, 0.0
      %1480 = vadd.xlane.f32.xlu0 %v1479
      %v1481 = vpop.xlane.xlu0 %1480
      %v1482 = vsel %vm1095, %v1478, 0.0
      %1483 = vadd.xlane.f32.xlu0 %v1482
      %v1484 = vpop.xlane.xlu0 %1483
      %v1485 = vrcp.pop %v1481
      %v1486 = vrcp.pop %v1484
      %v1487 = vmul.f32 %v1476, %v1485
      %v1488 = vmul.f32 %v1478, %v1486
      %v1489 = vld [vmem:[%s11] sm:$0xff]
      %v1490 = vld [vmem:[%s11 + $0x8] sm:$0xff]
      %v1491 = vadd.f32 %v1487, %v1489
      %v1492 = vadd.f32 %v1488, %v1490
      %1493 = vxpose.xlu0.b32.start [1/16] %v1199, 128
      %1494 = vxpose.xlu0.b32.cont [2/16] %v1200, 128
      %1495 = vxpose.xlu0.b32.cont [3/16] 0.0, 128
      %1496 = vxpose.xlu0.b32.cont [4/16] 0.0, 128
      %1497 = vxpose.xlu0.b32.cont [5/16] 0.0, 128
      %1498 = vxpose.xlu0.b32.cont [6/16] 0.0, 128
      %1499 = vxpose.xlu0.b32.cont [7/16] 0.0, 128
      %1500 = vxpose.xlu0.b32.cont [8/16] 0.0, 128
      %1501 = vxpose.xlu0.b32.cont [9/16] 0.0, 128
      %1502 = vxpose.xlu0.b32.cont [10/16] 0.0, 128
      %1503 = vxpose.xlu0.b32.cont [11/16] 0.0, 128
      %1504 = vxpose.xlu0.b32.cont [12/16] 0.0, 128
      %1505 = vxpose.xlu0.b32.cont [13/16] 0.0, 128
      %1506 = vxpose.xlu0.b32.cont [14/16] 0.0, 128
      %1507 = vxpose.xlu0.b32.cont [15/16] 0.0, 128
      %1508 = vxpose.xlu0.b32.end [16/16] 0.0, 128
      %v1509 = vpop.trf.xlu0
      %v1510 = vpop.trf.xlu0
      %v1511 = vpop.trf.xlu0
      %v1512 = vpop.trf.xlu0
      %v1513 = vpop.trf.xlu0
      %v1514 = vpop.trf.xlu0
      %v1515 = vpop.trf.xlu0
      %v1516 = vpop.trf.xlu0
      %v1517 = vpop.trf.xlu0
      %v1518 = vpop.trf.xlu0
      %v1519 = vpop.trf.xlu0
      %v1520 = vpop.trf.xlu0
      %v1521 = vpop.trf.xlu0
      %v1522 = vpop.trf.xlu0
      %v1523 = vpop.trf.xlu0
      %v1524 = vpop.trf.xlu0
      %v1525 = vld [vmem:[%s12] sm:$0xff]
      %v1526 = vld [vmem:[%s12 + $0x8] sm:$0xff]
      %v1528 = vsel %vm1095, %v1509, 0
      %v1531 = vsel %vm1095, %v1510, 0
      %v1534 = vsel %vm1095, %v1511, 0
      %v1537 = vsel %vm1095, %v1512, 0
      %1539 = vmatprep.subr.mxu0 0.0
      %1540 = vmatpush1.msra.mxu0 %v1525
      %1541 = vmatprep.subr.mxu0 0.0
      %1542 = vmatpush1.msra.mxu0 %v1526
      %1543 = vmatprep.subr.mxu0 0.0
      %1544 = vmatpush1.msra.mxu0 0.0
      %1545 = vmatprep.subr.mxu0 0.0
      %1546 = vmatpush1.msra.mxu0 0.0
      %1547 = vmatprep.subr.mxu0 0.0
      %1548 = vmatpush1.msra.mxu0 0.0
      %1549 = vmatprep.subr.mxu0 0.0
      %1550 = vmatpush1.msra.mxu0 0.0
      %1551 = vmatprep.subr.mxu0 0.0
      %1552 = vmatpush1.msra.mxu0 0.0
      %1553 = vmatprep.subr.mxu0 0.0
      %1554 = vmatpush1.msra.mxu0 0.0
      %1555 = vmatprep.subr.mxu0 0.0
      %1556 = vmatpush1.msra.mxu0 0.0
      %1557 = vmatprep.subr.mxu0 0.0
      %1558 = vmatpush1.msra.mxu0 0.0
      %1559 = vmatprep.subr.mxu0 0.0
      %1560 = vmatpush1.msra.mxu0 0.0
      %1561 = vmatprep.subr.mxu0 0.0
      %1562 = vmatpush1.msra.mxu0 0.0
      %1563 = vmatprep.subr.mxu0 0.0
      %1564 = vmatpush1.msra.mxu0 0.0
      %1565 = vmatprep.subr.mxu0 0.0
      %1566 = vmatpush1.msra.mxu0 0.0
      %1567 = vmatprep.subr.mxu0 0.0
      %1568 = vmatpush1.msra.mxu0 0.0
      %1569 = vmatprep.subr.mxu0 0.0
      %1570 = vmatpush1.msra.mxu0 0.0
      %1571 = vmatprep.subr.mxu0 0.0
      %1572 = vmatpush1.msra.mxu0 0.0
      %1573 = vmatprep.subr.mxu0 0.0
      %1574 = vmatpush1.msra.mxu0 0.0
      %1575 = vmatprep.subr.mxu0 0.0
      %1576 = vmatpush1.msra.mxu0 0.0
      %1577 = vmatprep.subr.mxu0 0.0
      %1578 = vmatpush1.msra.mxu0 0.0
      %1579 = vmatprep.subr.mxu0 0.0
      %1580 = vmatpush1.msra.mxu0 0.0
      %1581 = vmatprep.subr.mxu0 0.0
      %1582 = vmatpush1.msra.mxu0 0.0
      %1583 = vmatprep.subr.mxu0 0.0
      %1584 = vmatpush1.msra.mxu0 0.0
      %1585 = vmatprep.subr.mxu0 0.0
      %1586 = vmatpush1.msra.mxu0 0.0
      %1587 = vmatprep.subr.mxu0 0.0
      %1588 = vmatpush1.msra.mxu0 0.0
      %1589 = vmatprep.subr.mxu0 0.0
      %1590 = vmatpush1.msra.mxu0 0.0
      %1591 = vmatprep.subr.mxu0 0.0
      %1592 = vmatpush1.msra.mxu0 0.0
      %1593 = vmatprep.subr.mxu0 0.0
      %1594 = vmatpush1.msra.mxu0 0.0
      %1595 = vmatprep.subr.mxu0 0.0
      %1596 = vmatpush1.msra.mxu0 0.0
      %1597 = vmatprep.subr.mxu0 0.0
      %1598 = vmatpush1.msra.mxu0 0.0
      %1599 = vmatprep.subr.mxu0 0.0
      %1600 = vmatpush1.msra.mxu0 0.0
      %1601 = vmatprep.subr.mxu0 0.0
      %1602 = vmatpush1.msra.mxu0 0.0
      %1603 = vmatprep.mubr.f32.mxu0 0.0
      %1604 = vmatmul.mubr.f32.gmra.mrb[0].mxu0 %v1528
      %v1605 = vpop.f32.mrb[0].mxu0
      %v1606 = vadd.f32 0.0, %v1605
      %v1607 = vpop.f32.mrb[0].mxu0
      %1608 = vmatprep.mubr.f32.mxu0 0.0
      %1609 = vmatmul.mubr.f32.gmra.mrb[0].mxu0 %v1531
      %v1610 = vpop.f32.mrb[0].mxu0
      %v1611 = vadd.f32 0.0, %v1610
      %v1612 = vpop.f32.mrb[0].mxu0
      %1613 = vmatprep.mubr.f32.mxu0 0.0
      %1614 = vmatmul.mubr.f32.gmra.mrb[0].mxu0 %v1534
      %v1615 = vpop.f32.mrb[0].mxu0
      %v1616 = vadd.f32 0.0, %v1615
      %v1617 = vpop.f32.mrb[0].mxu0
      %1618 = vmatprep.mubr.f32.mxu0 0.0
      %1619 = vmatmul.mubr.f32.gmra.mrb[0].mxu0 %v1537
      %v1620 = vpop.f32.mrb[0].mxu0
      %v1621 = vadd.f32 0.0, %v1620
      %v1622 = vpop.f32.mrb[0].mxu0
      %1623 = vdwg.mxu0
      %v1624 = vld [vmem:[%s13] sm:$0xff]
      %v1625 = vld [vmem:[%s13 + $0x8] sm:$0xff]
      %v1626 = vld [vmem:[%s14] sm:$0x1]
      %v1628 = vlaneseq
      %v1629 = vshrl.u32 %v1628, 7
      %v1630 = vsub.s32 0, %v1629
      %v1631 = vrot.slane %v1626, %v1630
      %1633 = vmatprep.subr.mxu0 0.0
      %1634 = vmatpush1.msra.mxu0 %v1624
      %1635 = vmatprep.subr.mxu0 0.0
      %1636 = vmatpush1.msra.mxu0 %v1625
      %1637 = vmatprep.subr.mxu0 0.0
      %1638 = vmatpush1.msra.mxu0 0.0
      %1639 = vmatprep.subr.mxu0 0.0
      %1640 = vmatpush1.msra.mxu0 0.0
      %1641 = vmatprep.subr.mxu0 0.0
      %1642 = vmatpush1.msra.mxu0 0.0
      %1643 = vmatprep.subr.mxu0 0.0
      %1644 = vmatpush1.msra.mxu0 0.0
      %1645 = vmatprep.subr.mxu0 0.0
      %1646 = vmatpush1.msra.mxu0 0.0
      %1647 = vmatprep.subr.mxu0 0.0
      %1648 = vmatpush1.msra.mxu0 0.0
      %1649 = vmatprep.subr.mxu0 0.0
      %1650 = vmatpush1.msra.mxu0 0.0
      %1651 = vmatprep.subr.mxu0 0.0
      %1652 = vmatpush1.msra.mxu0 0.0
      %1653 = vmatprep.subr.mxu0 0.0
      %1654 = vmatpush1.msra.mxu0 0.0
      %1655 = vmatprep.subr.mxu0 0.0
      %1656 = vmatpush1.msra.mxu0 0.0
      %1657 = vmatprep.subr.mxu0 0.0
      %1658 = vmatpush1.msra.mxu0 0.0
      %1659 = vmatprep.subr.mxu0 0.0
      %1660 = vmatpush1.msra.mxu0 0.0
      %1661 = vmatprep.subr.mxu0 0.0
      %1662 = vmatpush1.msra.mxu0 0.0
      %1663 = vmatprep.subr.mxu0 0.0
      %1664 = vmatpush1.msra.mxu0 0.0
      %1665 = vmatprep.subr.mxu0 0.0
      %1666 = vmatpush1.msra.mxu0 0.0
      %1667 = vmatprep.subr.mxu0 0.0
      %1668 = vmatpush1.msra.mxu0 0.0
      %1669 = vmatprep.subr.mxu0 0.0
      %1670 = vmatpush1.msra.mxu0 0.0
      %1671 = vmatprep.subr.mxu0 0.0
      %1672 = vmatpush1.msra.mxu0 0.0
      %1673 = vmatprep.subr.mxu0 0.0
      %1674 = vmatpush1.msra.mxu0 0.0
      %1675 = vmatprep.subr.mxu0 0.0
      %1676 = vmatpush1.msra.mxu0 0.0
      %1677 = vmatprep.subr.mxu0 0.0
      %1678 = vmatpush1.msra.mxu0 0.0
      %1679 = vmatprep.subr.mxu0 0.0
      %1680 = vmatpush1.msra.mxu0 0.0
      %1681 = vmatprep.subr.mxu0 0.0
      %1682 = vmatpush1.msra.mxu0 0.0
      %1683 = vmatprep.subr.mxu0 0.0
      %1684 = vmatpush1.msra.mxu0 0.0
      %1685 = vmatprep.subr.mxu0 0.0
      %1686 = vmatpush1.msra.mxu0 0.0
      %1687 = vmatprep.subr.mxu0 0.0
      %1688 = vmatpush1.msra.mxu0 0.0
      %1689 = vmatprep.subr.mxu0 0.0
      %1690 = vmatpush1.msra.mxu0 0.0
      %1691 = vmatprep.subr.mxu0 0.0
      %1692 = vmatpush1.msra.mxu0 0.0
      %1693 = vmatprep.subr.mxu0 0.0
      %1694 = vmatpush1.msra.mxu0 0.0
      %1695 = vmatprep.subr.mxu0 0.0
      %1696 = vmatpush1.msra.mxu0 0.0
      %1697 = vmatprep.mubr.f32.mxu0 0.0
      %1698 = vmatmul.mubr.f32.gmra.mrb[0].mxu0 %v1528
      %v1699 = vpop.f32.mrb[0].mxu0
      %v1700 = vadd.f32 %v1631, %v1699
      %v1701 = vpop.f32.mrb[0].mxu0
      %1702 = vmatprep.mubr.f32.mxu0 0.0
      %1703 = vmatmul.mubr.f32.gmra.mrb[0].mxu0 %v1531
      %v1704 = vpop.f32.mrb[0].mxu0
      %v1705 = vadd.f32 %v1631, %v1704
      %v1706 = vpop.f32.mrb[0].mxu0
      %1707 = vmatprep.mubr.f32.mxu0 0.0
      %1708 = vmatmul.mubr.f32.gmra.mrb[0].mxu0 %v1534
      %v1709 = vpop.f32.mrb[0].mxu0
      %v1710 = vadd.f32 %v1631, %v1709
      %v1711 = vpop.f32.mrb[0].mxu0
      %1712 = vmatprep.mubr.f32.mxu0 0.0
      %1713 = vmatmul.mubr.f32.gmra.mrb[0].mxu0 %v1537
      %v1714 = vpop.f32.mrb[0].mxu0
      %v1715 = vadd.f32 %v1631, %v1714
      %v1716 = vpop.f32.mrb[0].mxu0
      %1717 = vdwg.mxu0
      %v1718 = vld [vmem:[%s18] sm:$0x1]
      %v1719 = vld [vmem:[%s19] sm:$0x1]
      %v1720 = vld [vmem:[%s15] sm:$0xff]
      %v1721 = vld [vmem:[%s15 + $0x8] sm:$0xff]
      %v1722 = vadd.f32 %v1491, %v1720
      %v1723 = vadd.f32 %v1492, %v1721
      %v1725 = vsel %vm1095, %v1606, 0
      %v1728 = vsel %vm1095, %v1611, 0
      %v1731 = vsel %vm1095, %v1616, 0
      %v1734 = vsel %vm1095, %v1621, 0
      %1736 = vmatprep.subr.mxu0 0.0
      %1737 = vmatpush1.msra.mxu0 %v1722
      %1738 = vmatprep.subr.mxu0 0.0
      %1739 = vmatpush1.msra.mxu0 %v1723
      %1740 = vmatprep.subr.mxu0 0.0
      %1741 = vmatpush1.msra.mxu0 0.0
      %1742 = vmatprep.subr.mxu0 0.0
      %1743 = vmatpush1.msra.mxu0 0.0
      %1744 = vmatprep.subr.mxu0 0.0
      %1745 = vmatpush1.msra.mxu0 0.0
      %1746 = vmatprep.subr.mxu0 0.0
      %1747 = vmatpush1.msra.mxu0 0.0
      %1748 = vmatprep.subr.mxu0 0.0
      %1749 = vmatpush1.msra.mxu0 0.0
      %1750 = vmatprep.subr.mxu0 0.0
      %1751 = vmatpush1.msra.mxu0 0.0
      %1752 = vmatprep.subr.mxu0 0.0
      %1753 = vmatpush1.msra.mxu0 0.0
      %1754 = vmatprep.subr.mxu0 0.0
      %1755 = vmatpush1.msra.mxu0 0.0
      %1756 = vmatprep.subr.mxu0 0.0
      %1757 = vmatpush1.msra.mxu0 0.0
      %1758 = vmatprep.subr.mxu0 0.0
      %1759 = vmatpush1.msra.mxu0 0.0
      %1760 = vmatprep.subr.mxu0 0.0
      %1761 = vmatpush1.msra.mxu0 0.0
      %1762 = vmatprep.subr.mxu0 0.0
      %1763 = vmatpush1.msra.mxu0 0.0
      %1764 = vmatprep.subr.mxu0 0.0
      %1765 = vmatpush1.msra.mxu0 0.0
      %1766 = vmatprep.subr.mxu0 0.0
      %1767 = vmatpush1.msra.mxu0 0.0
      %1768 = vmatprep.subr.mxu0 0.0
      %1769 = vmatpush1.msra.mxu0 0.0
      %1770 = vmatprep.subr.mxu0 0.0
      %1771 = vmatpush1.msra.mxu0 0.0
      %1772 = vmatprep.subr.mxu0 0.0
      %1773 = vmatpush1.msra.mxu0 0.0
      %1774 = vmatprep.subr.mxu0 0.0
      %1775 = vmatpush1.msra.mxu0 0.0
      %1776 = vmatprep.subr.mxu0 0.0
      %1777 = vmatpush1.msra.mxu0 0.0
      %1778 = vmatprep.subr.mxu0 0.0
      %1779 = vmatpush1.msra.mxu0 0.0
      %1780 = vmatprep.subr.mxu0 0.0
      %1781 = vmatpush1.msra.mxu0 0.0
      %1782 = vmatprep.subr.mxu0 0.0
      %1783 = vmatpush1.msra.mxu0 0.0
      %1784 = vmatprep.subr.mxu0 0.0
      %1785 = vmatpush1.msra.mxu0 0.0
      %1786 = vmatprep.subr.mxu0 0.0
      %1787 = vmatpush1.msra.mxu0 0.0
      %1788 = vmatprep.subr.mxu0 0.0
      %1789 = vmatpush1.msra.mxu0 0.0
      %1790 = vmatprep.subr.mxu0 0.0
      %1791 = vmatpush1.msra.mxu0 0.0
      %1792 = vmatprep.subr.mxu0 0.0
      %1793 = vmatpush1.msra.mxu0 0.0
      %1794 = vmatprep.subr.mxu0 0.0
      %1795 = vmatpush1.msra.mxu0 0.0
      %1796 = vmatprep.subr.mxu0 0.0
      %1797 = vmatpush1.msra.mxu0 0.0
      %1798 = vmatprep.subr.mxu0 0.0
      %1799 = vmatpush1.msra.mxu0 0.0
      %1800 = vmatprep.mubr.f32.mxu0 0.0
      %1801 = vmatmul.mubr.f32.gmra.mrb[0].mxu0 %v1725
      %v1802 = vpop.f32.mrb[0].mxu0
      %v1803 = vadd.f32 0.0, %v1802
      %v1804 = vpop.f32.mrb[0].mxu0
      %1805 = vmatprep.mubr.f32.mxu0 0.0
      %1806 = vmatmul.mubr.f32.gmra.mrb[0].mxu0 %v1728
      %v1807 = vpop.f32.mrb[0].mxu0
      %v1808 = vadd.f32 0.0, %v1807
      %v1809 = vpop.f32.mrb[0].mxu0
      %1810 = vmatprep.mubr.f32.mxu0 0.0
      %1811 = vmatmul.mubr.f32.gmra.mrb[0].mxu0 %v1731
      %v1812 = vpop.f32.mrb[0].mxu0
      %v1813 = vadd.f32 0.0, %v1812
      %v1814 = vpop.f32.mrb[0].mxu0
      %1815 = vmatprep.mubr.f32.mxu0 0.0
      %1816 = vmatmul.mubr.f32.gmra.mrb[0].mxu0 %v1734
      %v1817 = vpop.f32.mrb[0].mxu0
      %v1818 = vadd.f32 0.0, %v1817
      %v1819 = vpop.f32.mrb[0].mxu0
      %1820 = vdwg.mxu0
      %v1821 = vsel %vm1095, %v1803, 0.0
      %1822 = vadd.xlane.f32.xlu0 %v1821
      %v1823 = vpop.xlane.xlu0 %1822
      %v1824 = vsel %vm1095, %v1808, 0.0
      %1825 = vadd.xlane.f32.xlu0 %v1824
      %v1826 = vpop.xlane.xlu0 %1825
      %v1827 = vsel %vm1095, %v1813, 0.0
      %1828 = vadd.xlane.f32.xlu0 %v1827
      %v1829 = vpop.xlane.xlu0 %1828
      %v1830 = vsel %vm1095, %v1818, 0.0
      %1831 = vadd.xlane.f32.xlu0 %v1830
      %v1832 = vpop.xlane.xlu0 %1831
      %v1833 = vrcp.pop 16.0
      %v1834 = vmul.f32 %v1823, %v1833
      %v1835 = vmul.f32 %v1826, %v1833
      %v1836 = vmul.f32 %v1829, %v1833
      %v1837 = vmul.f32 %v1832, %v1833
      %v1838 = vsub.f32 %v1803, %v1834
      %v1839 = vsub.f32 %v1808, %v1835
      %v1840 = vsub.f32 %v1813, %v1836
      %v1841 = vsub.f32 %v1818, %v1837
      %v1842 = vmul.f32 %v1838, %v1838
      %v1843 = vmul.f32 %v1839, %v1839
      %v1844 = vmul.f32 %v1840, %v1840
      %v1845 = vmul.f32 %v1841, %v1841
      %v1846 = vsel %vm1095, %v1842, 0.0
      %1847 = vadd.xlane.f32.xlu0 %v1846
      %v1848 = vpop.xlane.xlu0 %1847
      %v1849 = vsel %vm1095, %v1843, 0.0
      %1850 = vadd.xlane.f32.xlu0 %v1849
      %v1851 = vpop.xlane.xlu0 %1850
      %v1852 = vsel %vm1095, %v1844, 0.0
      %1853 = vadd.xlane.f32.xlu0 %v1852
      %v1854 = vpop.xlane.xlu0 %1853
      %v1855 = vsel %vm1095, %v1845, 0.0
      %1856 = vadd.xlane.f32.xlu0 %v1855
      %v1857 = vpop.xlane.xlu0 %1856
      %v1858 = vmul.f32 %v1848, %v1833
      %v1859 = vmul.f32 %v1851, %v1833
      %v1860 = vmul.f32 %v1854, %v1833
      %v1861 = vmul.f32 %v1857, %v1833
      %v1862 = vadd.f32 %v1858, 1e-05
      %v1863 = vadd.f32 %v1859, 1e-05
      %v1864 = vadd.f32 %v1860, 1e-05
      %v1865 = vadd.f32 %v1861, 1e-05
      %v1866 = vrsqrt.pop %v1862
      %v1867 = vrsqrt.pop %v1863
      %v1868 = vrsqrt.pop %v1864
      %v1869 = vrsqrt.pop %v1865
      %v1870 = vmul.f32 %v1838, %v1866
      %v1871 = vmul.f32 %v1839, %v1867
      %v1872 = vmul.f32 %v1840, %v1868
      %v1873 = vmul.f32 %v1841, %v1869
      %v1875 = vlaneseq
      %v1876 = vshrl.u32 %v1875, 7
      %v1877 = vsub.s32 0, %v1876
      %v1878 = vrot.slane %v1718, %v1877
      %v1880 = vmul.f32 %v1870, %v1878
      %v1881 = vmul.f32 %v1871, %v1878
      %v1882 = vmul.f32 %v1872, %v1878
      %v1883 = vmul.f32 %v1873, %v1878
      %v1885 = vlaneseq
      %v1886 = vshrl.u32 %v1885, 7
      %v1887 = vsub.s32 0, %v1886
      %v1888 = vrot.slane %v1719, %v1887
      %v1890 = vadd.f32 %v1880, %v1888
      %v1891 = vadd.f32 %v1881, %v1888
      %v1892 = vadd.f32 %v1882, %v1888
      %v1893 = vadd.f32 %v1883, %v1888
      %v1894 = vld [vmem:[%s16] sm:$0xff]
      %v1895 = vld [vmem:[%s16 + $0x8] sm:$0xff]
      %v1896 = vadd.f32 %v1491, %v1894
      %v1897 = vadd.f32 %v1492, %v1895
      %v1898 = vld [vmem:[%s17] sm:$0x1]
      %v1900 = vlaneseq
      %v1901 = vshrl.u32 %v1900, 7
      %v1902 = vsub.s32 0, %v1901
      %v1903 = vrot.slane %v1898, %v1902
      %v1906 = vsel %vm1095, %v1700, 0
      %v1909 = vsel %vm1095, %v1705, 0
      %v1912 = vsel %vm1095, %v1710, 0
      %v1915 = vsel %vm1095, %v1715, 0
      %1917 = vmatprep.subr.mxu0 0.0
      %1918 = vmatpush1.msra.mxu0 %v1896
      %1919 = vmatprep.subr.mxu0 0.0
      %1920 = vmatpush1.msra.mxu0 %v1897
      %1921 = vmatprep.subr.mxu0 0.0
      %1922 = vmatpush1.msra.mxu0 0.0
      %1923 = vmatprep.subr.mxu0 0.0
      %1924 = vmatpush1.msra.mxu0 0.0
      %1925 = vmatprep.subr.mxu0 0.0
      %1926 = vmatpush1.msra.mxu0 0.0
      %1927 = vmatprep.subr.mxu0 0.0
      %1928 = vmatpush1.msra.mxu0 0.0
      %1929 = vmatprep.subr.mxu0 0.0
      %1930 = vmatpush1.msra.mxu0 0.0
      %1931 = vmatprep.subr.mxu0 0.0
      %1932 = vmatpush1.msra.mxu0 0.0
      %1933 = vmatprep.subr.mxu0 0.0
      %1934 = vmatpush1.msra.mxu0 0.0
      %1935 = vmatprep.subr.mxu0 0.0
      %1936 = vmatpush1.msra.mxu0 0.0
      %1937 = vmatprep.subr.mxu0 0.0
      %1938 = vmatpush1.msra.mxu0 0.0
      %1939 = vmatprep.subr.mxu0 0.0
      %1940 = vmatpush1.msra.mxu0 0.0
      %1941 = vmatprep.subr.mxu0 0.0
      %1942 = vmatpush1.msra.mxu0 0.0
      %1943 = vmatprep.subr.mxu0 0.0
      %1944 = vmatpush1.msra.mxu0 0.0
      %1945 = vmatprep.subr.mxu0 0.0
      %1946 = vmatpush1.msra.mxu0 0.0
      %1947 = vmatprep.subr.mxu0 0.0
      %1948 = vmatpush1.msra.mxu0 0.0
      %1949 = vmatprep.subr.mxu0 0.0
      %1950 = vmatpush1.msra.mxu0 0.0
      %1951 = vmatprep.subr.mxu0 0.0
      %1952 = vmatpush1.msra.mxu0 0.0
      %1953 = vmatprep.subr.mxu0 0.0
      %1954 = vmatpush1.msra.mxu0 0.0
      %1955 = vmatprep.subr.mxu0 0.0
      %1956 = vmatpush1.msra.mxu0 0.0
      %1957 = vmatprep.subr.mxu0 0.0
      %1958 = vmatpush1.msra.mxu0 0.0
      %1959 = vmatprep.subr.mxu0 0.0
      %1960 = vmatpush1.msra.mxu0 0.0
      %1961 = vmatprep.subr.mxu0 0.0
      %1962 = vmatpush1.msra.mxu0 0.0
      %1963 = vmatprep.subr.mxu0 0.0
      %1964 = vmatpush1.msra.mxu0 0.0
      %1965 = vmatprep.subr.mxu0 0.0
      %1966 = vmatpush1.msra.mxu0 0.0
      %1967 = vmatprep.subr.mxu0 0.0
      %1968 = vmatpush1.msra.mxu0 0.0
      %1969 = vmatprep.subr.mxu0 0.0
      %1970 = vmatpush1.msra.mxu0 0.0
      %1971 = vmatprep.subr.mxu0 0.0
      %1972 = vmatpush1.msra.mxu0 0.0
      %1973 = vmatprep.subr.mxu0 0.0
      %1974 = vmatpush1.msra.mxu0 0.0
      %1975 = vmatprep.subr.mxu0 0.0
      %1976 = vmatpush1.msra.mxu0 0.0
      %1977 = vmatprep.subr.mxu0 0.0
      %1978 = vmatpush1.msra.mxu0 0.0
      %1979 = vmatprep.subr.mxu0 0.0
      %1980 = vmatpush1.msra.mxu0 0.0
      %1981 = vmatprep.mubr.f32.mxu0 0.0
      %1982 = vmatmul.mubr.f32.gmra.mrb[0].mxu0 %v1906
      %v1983 = vpop.f32.mrb[0].mxu0
      %v1984 = vadd.f32 %v1903, %v1983
      %v1985 = vpop.f32.mrb[0].mxu0
      %1986 = vmatprep.mubr.f32.mxu0 0.0
      %1987 = vmatmul.mubr.f32.gmra.mrb[0].mxu0 %v1909
      %v1988 = vpop.f32.mrb[0].mxu0
      %v1989 = vadd.f32 %v1903, %v1988
      %v1990 = vpop.f32.mrb[0].mxu0
      %1991 = vmatprep.mubr.f32.mxu0 0.0
      %1992 = vmatmul.mubr.f32.gmra.mrb[0].mxu0 %v1912
      %v1993 = vpop.f32.mrb[0].mxu0
      %v1994 = vadd.f32 %v1903, %v1993
      %v1995 = vpop.f32.mrb[0].mxu0
      %1996 = vmatprep.mubr.f32.mxu0 0.0
      %1997 = vmatmul.mubr.f32.gmra.mrb[0].mxu0 %v1915
      %v1998 = vpop.f32.mrb[0].mxu0
      %v1999 = vadd.f32 %v1903, %v1998
      %v2000 = vpop.f32.mrb[0].mxu0
      %2001 = vdwg.mxu0
      %v2002 = vsel %vm1095, %v1984, 0.0
      %2003 = vadd.xlane.f32.xlu0 %v2002
      %v2004 = vpop.xlane.xlu0 %2003
      %v2005 = vsel %vm1095, %v1989, 0.0
      %2006 = vadd.xlane.f32.xlu0 %v2005
      %v2007 = vpop.xlane.xlu0 %2006
      %v2008 = vsel %vm1095, %v1994, 0.0
      %2009 = vadd.xlane.f32.xlu0 %v2008
      %v2010 = vpop.xlane.xlu0 %2009
      %v2011 = vsel %vm1095, %v1999, 0.0
      %2012 = vadd.xlane.f32.xlu0 %v2011
      %v2013 = vpop.xlane.xlu0 %2012
      %v2014 = vmul.f32 %v2004, %v1833
      %v2015 = vmul.f32 %v2007, %v1833
      %v2016 = vmul.f32 %v2010, %v1833
      %v2017 = vmul.f32 %v2013, %v1833
      %v2018 = vsub.f32 %v1984, %v2014
      %v2019 = vsub.f32 %v1989, %v2015
      %v2020 = vsub.f32 %v1994, %v2016
      %v2021 = vsub.f32 %v1999, %v2017
      %v2022 = vmul.f32 %v2018, %v2018
      %v2023 = vmul.f32 %v2019, %v2019
      %v2024 = vmul.f32 %v2020, %v2020
      %v2025 = vmul.f32 %v2021, %v2021
      %v2026 = vsel %vm1095, %v2022, 0.0
      %2027 = vadd.xlane.f32.xlu0 %v2026
      %v2028 = vpop.xlane.xlu0 %2027
      %v2029 = vsel %vm1095, %v2023, 0.0
      %2030 = vadd.xlane.f32.xlu0 %v2029
      %v2031 = vpop.xlane.xlu0 %2030
      %v2032 = vsel %vm1095, %v2024, 0.0
      %2033 = vadd.xlane.f32.xlu0 %v2032
      %v2034 = vpop.xlane.xlu0 %2033
      %v2035 = vsel %vm1095, %v2025, 0.0
      %2036 = vadd.xlane.f32.xlu0 %v2035
      %v2037 = vpop.xlane.xlu0 %2036
      %v2038 = vmul.f32 %v2028, %v1833
      %v2039 = vmul.f32 %v2031, %v1833
      %v2040 = vmul.f32 %v2034, %v1833
      %v2041 = vmul.f32 %v2037, %v1833
      %v2042 = vadd.f32 %v2038, 1e-05
      %v2043 = vadd.f32 %v2039, 1e-05
      %v2044 = vadd.f32 %v2040, 1e-05
      %v2045 = vadd.f32 %v2041, 1e-05
      %v2046 = vrsqrt.pop %v2042
      %v2047 = vrsqrt.pop %v2043
      %v2048 = vrsqrt.pop %v2044
      %v2049 = vrsqrt.pop %v2045
      %v2050 = vmul.f32 %v2018, %v2046
      %v2051 = vmul.f32 %v2019, %v2047
      %v2052 = vmul.f32 %v2020, %v2048
      %v2053 = vmul.f32 %v2021, %v2049
      %v2054 = vmul.f32 %v2050, %v1878
      %v2055 = vmul.f32 %v2051, %v1878
      %v2056 = vmul.f32 %v2052, %v1878
      %v2057 = vmul.f32 %v2053, %v1878
      %v2058 = vadd.f32 %v2054, %v1888
      %v2059 = vadd.f32 %v2055, %v1888
      %v2060 = vadd.f32 %v2056, %v1888
      %v2061 = vadd.f32 %v2057, %v1888
      %v2062 = vmul.f32 %v2058, 0.5
      %v2063 = vmul.f32 %v2059, 0.5
      %v2064 = vmul.f32 %v2060, 0.5
      %v2065 = vmul.f32 %v2061, 0.5
      %v2066 = vmul.f32 %v2058, 0.70710677
      %v2067 = vmul.f32 %v2059, 0.70710677
      %v2068 = vmul.f32 %v2060, 0.70710677
      %v2069 = vmul.f32 %v2061, 0.70710677
      %v2070 = verf.f32.pop %v2066
      %v2071 = verf.f32.pop %v2067
      %v2072 = verf.f32.pop %v2068
      %v2073 = verf.f32.pop %v2069
      %v2074 = vadd.f32 %v2070, 1.0
      %v2075 = vadd.f32 %v2071, 1.0
      %v2076 = vadd.f32 %v2072, 1.0
      %v2077 = vadd.f32 %v2073, 1.0
      %v2078 = vmul.f32 %v2062, %v2074
      %v2079 = vmul.f32 %v2063, %v2075
      %v2080 = vmul.f32 %v2064, %v2076
      %v2081 = vmul.f32 %v2065, %v2077
      %v2082 = vld [vmem:[%s676] sm:$0xff]
      %v2083 = vld [vmem:[%s676 + $0x8] sm:$0xff]
      %v2084 = vld [vmem:[%s676 + $0x10] sm:$0xff]
      %v2085 = vld [vmem:[%s676 + $0x18] sm:$0xff]
      %v2086 = vsub.f32 %v2082, %v1890
      %v2087 = vsub.f32 %v2083, %v1891
      %v2088 = vsub.f32 %v2084, %v1892
      %v2089 = vsub.f32 %v2085, %v1893
      %v2090 = vmul.f32 %v2078, %v2086
      %v2091 = vmul.f32 %v2079, %v2087
      %v2092 = vmul.f32 %v2080, %v2088
      %v2093 = vmul.f32 %v2081, %v2089
      %v2094 = vadd.f32 %v1890, %v2090
      %v2095 = vadd.f32 %v1891, %v2091
      %v2096 = vadd.f32 %v1892, %v2092
      %v2097 = vadd.f32 %v1893, %v2093
      %vm2098 = vcmp.gt.f32.partialorder %v2094, 0.0
      %vm2099 = vcmp.gt.f32.partialorder %v2095, 0.0
      %vm2100 = vcmp.gt.f32.partialorder %v2096, 0.0
      %vm2101 = vcmp.gt.f32.partialorder %v2097, 0.0
      %v2102 = vmin.f32 %v2094, 0.0
      %v2103 = vmin.f32 %v2095, 0.0
      %v2104 = vmin.f32 %v2096, 0.0
      %v2105 = vmin.f32 %v2097, 0.0
      %v2106 = vmul.f32 %v2102, 1.442695
      %v2107 = vpow.pop %v2106
      %v2108 = vmul.f32 %v2103, 1.442695
      %v2109 = vpow.pop %v2108
      %v2110 = vmul.f32 %v2104, 1.442695
      %v2111 = vpow.pop %v2110
      %v2112 = vmul.f32 %v2105, 1.442695
      %v2113 = vpow.pop %v2112
      %v2114 = vsub.f32 %v2107, 1.0
      %v2115 = vsub.f32 %v2109, 1.0
      %v2116 = vsub.f32 %v2111, 1.0
      %v2117 = vsub.f32 %v2113, 1.0
      %v2118 = vsel %vm2098, %v2094, %v2114
      %v2119 = vsel %vm2099, %v2095, %v2115
      %v2120 = vsel %vm2100, %v2096, %v2116
      %v2121 = vsel %vm2101, %v2097, %v2117
      %v2122 = vsub.f32 %v2118, %v822
      %v2123 = vsub.f32 %v2119, %v823
      %v2124 = vsub.f32 %v2120, %v824
      %v2125 = vsub.f32 %v2121, %v825
      %v2126 = vmul.f32 %v2078, %v2122
      %v2127 = vmul.f32 %v2079, %v2123
      %v2128 = vmul.f32 %v2080, %v2124
      %v2129 = vmul.f32 %v2081, %v2125
      %v2130 = vadd.f32 %v822, %v2126
      %v2131 = vadd.f32 %v823, %v2127
      %v2132 = vadd.f32 %v824, %v2128
      %v2133 = vadd.f32 %v825, %v2129
      %2134 = vst.msk [vmem:[%s681] sm:$0xff] %vm1095, %v2130
      %2135 = vst.msk [vmem:[%s681 + $0x8] sm:$0xff] %vm1095, %v2131
      %2136 = vst.msk [vmem:[%s681 + $0x10] sm:$0xff] %vm1095, %v2132
      %2137 = vst.msk [vmem:[%s681 + $0x18] sm:$0xff] %vm1095, %v2133
      %2138 = vst.msk [vmem:[%s686] sm:$0xff] %vm1095, %v2094
      %2139 = vst.msk [vmem:[%s686 + $0x8] sm:$0xff] %vm1095, %v2095
      %2140 = vst.msk [vmem:[%s686 + $0x10] sm:$0xff] %vm1095, %v2096
      %2141 = vst.msk [vmem:[%s686 + $0x18] sm:$0xff] %vm1095, %v2097
      %p2142 = scmp.lt.s32.totalorder %s33, 1
      %s2143 = scalar_select %p2142, %s33, 1
      %s2144 = smul.addr %s2143, 4
      %s2145 = smul.addr %s2144, 8
      %s2146 = scalar_lea.vmem %s20, %s2145
      %p2147 = scmp.lt.s32.totalorder %s33, 1
      %s2148 = scalar_select %p2147, %s33, 1
      %s2149 = smul.addr %s2148, 4
      %s2150 = smul.addr %s2149, 8
      %s2151 = scalar_lea.vmem %s21, %s2150
      // Predicated region
      $region101: #{tpu_custom_call.1} parent=99 // pred_check
        %p2152 = pneg %p481
      $region102: #{tpu_custom_call.1} parent=99 // pred_check_branch
        %2154 = sbr.rel (%p2152) target = $region104
      $region103: #{tpu_custom_call.1} parent=99 // pred_region
        _
      $region104: #{tpu_custom_call.1} parent=99 // pred_fallthru
        _
      // Predicated region
      $region105: #{tpu_custom_call.1} parent=99 // pred_check
        %p2155 = pneg %p507
      $region106: #{tpu_custom_call.1} parent=99 // pred_check_branch
        %2157 = sbr.rel (%p2155) target = $region108
      $region107: #{tpu_custom_call.1} parent=99 // pred_region
        _
      $region108: #{tpu_custom_call.1} parent=99 // pred_fallthru
        _
    $region100: #{tpu_custom_call.1} parent=5 // pred_fallthru
      _
    %p2158 = scmp.le.s32.totalorder 2, %s28
    // Predicated region
    $region109: #{tpu_custom_call.1} parent=5 // pred_check
      %p2159 = pneg %p2158
    $region110: #{tpu_custom_call.1} parent=5 // pred_check_branch
      %2161 = sbr.rel (%p2159) target = $region112
    $region111: #{tpu_custom_call.1} parent=5 // pred_region
      %s2162 = ssub.s32 %s28, 2
      // Predicated region
      $region113: #{tpu_custom_call.1} parent=111 // pred_check
        %p2163 = pneg %p487
      $region114: #{tpu_custom_call.1} parent=111 // pred_check_branch
        %2165 = sbr.rel (%p2163) target = $region116
      $region115: #{tpu_custom_call.1} parent=111 // pred_region
        %p2166 = scmp.lt.s32.totalorder %s34, 1
        %s2167 = scalar_select %p2166, %s34, 1
        %s2168 = smul.addr %s2167, 4
        %s2169 = smul.addr %s2168, 8
        %s2170 = scalar_lea.vmem %s20, %s2169
      $region116: #{tpu_custom_call.1} parent=111 // pred_fallthru
        _
      // Predicated region
      $region117: #{tpu_custom_call.1} parent=111 // pred_check
        %p2171 = pneg %p513
      $region118: #{tpu_custom_call.1} parent=111 // pred_check_branch
        %2173 = sbr.rel (%p2171) target = $region120
      $region119: #{tpu_custom_call.1} parent=111 // pred_region
        %p2174 = scmp.lt.s32.totalorder %s34, 1
        %s2175 = scalar_select %p2174, %s34, 1
        %s2176 = smul.addr %s2175, 4
        %s2177 = smul.addr %s2176, 8
        %s2178 = scalar_lea.vmem %s21, %s2177
      $region120: #{tpu_custom_call.1} parent=111 // pred_fallthru
        _
    $region112: #{tpu_custom_call.1} parent=5 // pred_fallthru
      _
  $region6: #{tpu_custom_call.1} parent=0 // loop_footer
    %s32 = sadd.s32 1, %s28
  $region7: #{tpu_custom_call.1} parent=0 // loop_footer_branch
    %27 = sbr.rel target = $region3
  $region8: #{tpu_custom_call.1} parent=0 // loop_exit
    _

</llo_original>
